<compile_context>
chip_gen: v7x
topology: tpu7x:2x2x1
jax: 0.10.0
libtpu: 0.0.40
codegen_flags: <defaults>
</compile_context>

<pallas_src>
import functools

import jax
import jax.numpy as jnp
import numpy as np
from jax.experimental import pallas as pl
from jax.experimental.pallas import tpu as pltpu


def gmm_kernel(x_ref, a_ref, nb_ref, c_ref, out_ref, *,
               n_clusters, n_dim, lane_chunk, strip):
    """Per-tile Gaussian-mixture squared-log-likelihood partial sums.

    x_ref  : (n_dim, 8, lane_chunk)  VMEM tile of 8*lane_chunk samples,
             samples dense on (sublane, lane)
    a_ref  : (K*D*D,)  SMEM  flattened L_k^{-1} / sqrt(2) (row-major per cluster)
    nb_ref : (K*D,)    SMEM  flattened -(L_k^{-1} @ mu_k) / sqrt(2)
    c_ref  : (K,)      SMEM  per-cluster constant -0.5*(D*log(2pi)+logdet_k)+w_k
    out_ref: (1, 8, lane_chunk)  per-lane partial sums of (logsumexp)^2
             (resident across the inner / "arbitrary" grid axis)
    """
    inner = pl.program_id(1)

    @pl.when(inner == 0)
    def _():
        out_ref[...] = jnp.zeros_like(out_ref)

    # Strip-mine the lane axis so the fully unrolled K/D chain keeps only a
    # handful of (8, strip) live arrays (stays inside the 64-vreg file).
    n_strips = lane_chunk // strip
    for s in range(n_strips):
        off = s * strip                                    # static offset

        # Dense per-feature sub-slabs, each (8, strip).
        xrows = [x_ref[j, :, pl.ds(off, strip)] for j in range(n_dim)]

        # Per-cluster log-likelihood.  D and K are tiny & static -> fully
        # unrolled scalar-broadcast FMAs on the VPU.  The -0.5 is pre-folded
        # into a_ref / nb_ref, so lls_k = c_k - || A'_k x + nb'_k ||^2.
        lls = []
        for k in range(n_clusters):
            q = None
            for d in range(n_dim):
                z = nb_ref[k * n_dim + d]                  # scalar
                for j in range(n_dim):
                    z = z + a_ref[(k * n_dim + d) * n_dim + j] * xrows[j]
                zz = z * z
                q = zz if q is None else q + zz            # (8, strip)
            lls.append(c_ref[k] - q)                       # (8, strip)

        # logsumexp over clusters (K small & static -> unrolled, VPU + EUP).
        m = lls[0]
        for k in range(1, n_clusters):
            m = jnp.maximum(m, lls[k])
        ssum = jnp.exp(lls[0] - m)
        for k in range(1, n_clusters):
            ssum = ssum + jnp.exp(lls[k] - m)
        lse = m + jnp.log(ssum)

        # Lane-dense accumulation into the resident output block; the single
        # cross-lane reduction happens once, outside the kernel.
        out_ref[:, :, pl.ds(off, strip)] += (lse * lse)[None]


def _default_core_split():
    """2 for chips with two TensorCores per device, else 1."""
    try:
        kind = jax.devices()[0].device_kind.lower()
    except Exception:
        return 1
    if any(tag in kind for tag in ("v7", "v5p", "v4")):
        return 2
    return 1


def _pick_strip(lane_chunk):
    for cand in (512, 384, 256, 128):
        if lane_chunk % cand == 0:
            return cand
    return lane_chunk


def nm_gmm_forward(X, mu, chol, weights, *, tile_n=131072, core_split=None,
                   feature_major=False):
    """Forward pass: mean over samples of (logsumexp_k ll_k(x))^2.

    X: (N, n_dim), or (n_dim, N) if feature_major=True (avoids the extra
    HBM transpose pass entirely).
    """
    if feature_major:
        n_dim, n = X.shape
    else:
        n, n_dim = X.shape
    n_clusters = mu.shape[0]

    # ---- glue: tiny K x D x D linear algebra in plain JAX ----
    # TODO(synk): cholesky / triangular inverse have no Pallas equivalent; done
    # on the (K, D, D) parameters outside the kernel (D is tiny).  Note the
    # PyTorch module runs in float64; the TPU kernel computes float32.
    sigma = jnp.einsum("kij,klj->kil", chol, chol) + jnp.eye(n_dim, dtype=chol.dtype)
    L = jnp.linalg.cholesky(sigma)                                       # (K, D, D)
    logdet = 2.0 * jnp.sum(jnp.log(jnp.diagonal(L, axis1=1, axis2=2)), axis=1)
    eye = jnp.eye(n_dim, dtype=L.dtype)
    A = jax.vmap(
        lambda Lk: jax.scipy.linalg.solve_triangular(Lk, eye, lower=True))(L)  # L^{-1}
    b = jnp.einsum("kij,kj->ki", A, mu)                                  # A_k @ mu_k
    c = -0.5 * (n_dim * jnp.log(2.0 * jnp.pi) + logdet) + weights        # (K,)

    # Fold the -0.5 into the per-sample math: scale A and b by 1/sqrt(2) and
    # negate b, so in-kernel lls_k = c_k - || A'_k x + nb'_k ||^2 (no per-sample
    # 0.5 multiply, no scalar negate).
    inv_sqrt2 = np.float32(1.0 / np.sqrt(2.0))
    a_flat = (A.astype(jnp.float32) * inv_sqrt2).reshape(-1)     # (K*D*D,) -> SMEM
    nb_flat = (-(b.astype(jnp.float32) * inv_sqrt2)).reshape(-1)  # (K*D,)  -> SMEM
    c_flat = c.astype(jnp.float32).reshape(-1)                   # (K,)     -> SMEM

    # ---- tiling: samples dense on (sublane, lane) ----
    quantum = 8 * 128                                    # one full dense tile row
    tile_n = min(int(tile_n), 1 << 20, pl.cdiv(n, quantum) * quantum)
    tile_n = max(quantum, (tile_n // quantum) * quantum)
    lane_chunk = tile_n // 8
    strip = _pick_strip(lane_chunk)

    num_tiles = pl.cdiv(n, tile_n)
    if core_split is None:
        core_split = _default_core_split()               # 1 on v5e/v6e, 2 on v7x
    g_outer = core_split if (num_tiles > 1 and core_split > 1) else 1
    num_tiles = pl.cdiv(num_tiles, g_outer) * g_outer
    inner_steps = num_tiles // g_outer
    n_pad = num_tiles * tile_n

    # Feature-major, no feature padding in HBM; only N is padded with zeros
    # (their exact contribution is subtracted after the kernel, no in-kernel
    # mask).  Callers passing X feature-major skip the transpose pass.
    xt = X.astype(jnp.float32) if feature_major else X.astype(jnp.float32).T
    if n_pad > n:
        xt = jnp.pad(xt, ((0, 0), (0, n_pad - n)))
    xr = xt.reshape(n_dim, n_pad // lane_chunk, lane_chunk)   # free row-major split

    kernel = functools.partial(
        gmm_kernel, n_clusters=n_clusters, n_dim=n_dim,
        lane_chunk=lane_chunk, strip=strip)

    x_index_map = lambda o, i, s=inner_steps: (0, o * s + i, 0)

    # VMEM: double-buffered x tiles + resident accumulator block.  Only raise
    # the scoped limit when the default (16 MiB on v5e) would be exceeded; cap
    # well under v7x's 64 MiB physical VMEM.
    vmem_need = 4 * tile_n * (2 * n_dim + 2)
    vmem_limit = None
    if vmem_need > (12 << 20):
        vmem_limit = min(vmem_need + (8 << 20), 48 << 20)

    partial = pl.pallas_call(
        kernel,
        out_shape=jax.ShapeDtypeStruct((g_outer, 8, lane_chunk), jnp.float32),
        grid=(g_outer, inner_steps),
        in_specs=[
            pl.BlockSpec((n_dim, 8, lane_chunk), x_index_map),
            pl.BlockSpec(memory_space=pltpu.MemorySpace.SMEM),
            pl.BlockSpec(memory_space=pltpu.MemorySpace.SMEM),
            pl.BlockSpec(memory_space=pltpu.MemorySpace.SMEM),
        ],
        out_specs=pl.BlockSpec((1, 8, lane_chunk), lambda o, i: (o, 0, 0)),
        compiler_params=pltpu.CompilerParams(
            dimension_semantics=("parallel", "arbitrary"),
            vmem_limit_bytes=vmem_limit),
    )(xr, a_flat, nb_flat, c_flat)

    # One cheap cross-lane reduction of the per-lane/per-core partials, then
    # remove the exact contribution of the zero-padded samples.
    total = jnp.sum(partial)
    if n_pad > n:
        nb = nb_flat.reshape(n_clusters, n_dim)
        lse0 = jax.scipy.special.logsumexp(c_flat - jnp.sum(nb * nb, axis=-1))
        total = total - (n_pad - n) * lse0 * lse0
    return total / n


def reference_forward(X, mu, chol, weights):
    """Pure-JAX reference mirroring the PyTorch code path."""
    k, d = mu.shape
    sigma = jnp.einsum("kij,klj->kil", chol, chol) + jnp.eye(d, dtype=chol.dtype)
    L = jnp.linalg.cholesky(sigma)
    logdet = 2.0 * jnp.sum(jnp.log(jnp.diagonal(L, axis1=1, axis2=2)), axis=1)
    diff = X[None, :, :] - mu[:, None, :]                                # (K, N, D)
    solve = jax.vmap(
        lambda Lk, dk: jax.scipy.linalg.solve_triangular(Lk, dk.T, lower=True).T)
    z = solve(L, diff)                                                   # (K, N, D)
    q = jnp.sum(z ** 2, axis=-1)                                         # (K, N)
    ll = -0.5 * (q + d * jnp.log(2.0 * jnp.pi) + logdet[:, None]) + weights[:, None]
    lse = jax.scipy.special.logsumexp(ll, axis=0)                        # (N,)
    return jnp.mean(lse ** 2)


if __name__ == "__main__":
    n_clusters, n_dim, n_samples = 3, 2, 10000

    key = jax.random.PRNGKey(0)
    k_mu, k_chol, k_w, k_x = jax.random.split(key, 4)
    # Deterministic parameter init matching the module's __init__ distributions.
    mu = jax.random.normal(k_mu, (n_clusters, n_dim), jnp.float32)
    chol = jax.random.normal(k_chol, (n_clusters, n_dim, n_dim), jnp.float32)
    weights = -2.0 + 2.0 * jax.random.normal(k_w, (n_clusters,), jnp.float32)
    X = jax.random.normal(k_x, (n_samples, n_dim), jnp.float32)

    # Feature-major input: avoids a standalone HBM transpose pass entirely.
    out = nm_gmm_forward(jnp.asarray(X.T), mu, chol, weights, feature_major=True)
    out = jax.block_until_ready(out)

    ref = reference_forward(X, mu, chol, weights)
    assert np.allclose(np.asarray(out), np.asarray(ref), rtol=2e-3, atol=2e-3), (
        float(out), float(ref))
    print("KERNEL_OK")
</pallas_src>

<mosaic_0001>
module attributes {stable_mosaic.version = 11 : i64} {
  func.func @gmm_kernel(%arg0: i32, %arg1: i32, %arg2: memref<2x8x1280xf32, #tpu.memory_space<vmem>>, %arg3: memref<12xf32, #tpu.memory_space<smem>>, %arg4: memref<6xf32, #tpu.memory_space<smem>>, %arg5: memref<3xf32, #tpu.memory_space<smem>>, %arg6: memref<1x8x1280xf32, #tpu.memory_space<vmem>>) attributes {dimension_semantics = [#tpu.dimension_semantics<parallel>, #tpu.dimension_semantics<arbitrary>], iteration_bounds = array<i64: 1, 1>, scalar_prefetch = 0 : i64, scratch_operands = 0 : i64, tpu.core_type = #tpu.core_type<tc>, window_params = [{transform_indices = @transform_0, window_bounds = array<i64: 2, 8, 1280>}, {transform_indices = @transform_1, window_bounds = array<i64: 12>}, {transform_indices = @transform_2, window_bounds = array<i64: 6>}, {transform_indices = @transform_3, window_bounds = array<i64: 3>}, {transform_indices = @transform_4, window_bounds = array<i64: 1, 8, 1280>}]} {
    %c0_i32 = arith.constant 0 : i32
    %0 = arith.cmpi eq, %arg1, %c0_i32 : i32
    %1 = arith.extui %0 : i1 to i32
    %c0_i32_0 = arith.constant 0 : i32
    %2 = arith.cmpi ne, %1, %c0_i32_0 : i32
    scf.if %2 {
      %cst = arith.constant 0.000000e+00 : f32
      %498 = vector.broadcast %cst : f32 to vector<1x8x1280xf32>
      %c0_150 = arith.constant 0 : index
      %c0_151 = arith.constant 0 : index
      %c0_152 = arith.constant 0 : index
      %499 = vector.load %arg6[%c0_150, %c0_151, %c0_152] : memref<1x8x1280xf32, #tpu.memory_space<vmem>>, vector<1x8x1280xf32>
      tpu.vector_store %arg6[%c0_150, %c0_151, %c0_152], %498 {strides = array<i32>} : memref<1x8x1280xf32, #tpu.memory_space<vmem>>, vector<1x8x1280xf32>,
    } else {
    }
    %c0 = arith.constant 0 : index
    %c0_1 = arith.constant 0 : index
    %c0_2 = arith.constant 0 : index
    %3 = vector.load %arg2[%c0, %c0_1, %c0_2] : memref<2x8x1280xf32, #tpu.memory_space<vmem>>, vector<1x8x256xf32>
    %4 = vector.shape_cast %3 : vector<1x8x256xf32> to vector<8x256xf32>
    %c1 = arith.constant 1 : index
    %c0_3 = arith.constant 0 : index
    %c0_4 = arith.constant 0 : index
    %5 = vector.load %arg2[%c1, %c0_3, %c0_4] : memref<2x8x1280xf32, #tpu.memory_space<vmem>>, vector<1x8x256xf32>
    %6 = vector.shape_cast %5 : vector<1x8x256xf32> to vector<8x256xf32>
    %c0_5 = arith.constant 0 : index
    %7 = memref.load %arg4[%c0_5] : memref<6xf32, #tpu.memory_space<smem>>
    %c0_6 = arith.constant 0 : index
    %8 = memref.load %arg3[%c0_6] : memref<12xf32, #tpu.memory_space<smem>>
    %9 = vector.broadcast %8 : f32 to vector<8x256xf32>
    %10 = arith.mulf %9, %4 : vector<8x256xf32>
    %11 = vector.broadcast %7 : f32 to vector<8x256xf32>
    %12 = arith.addf %11, %10 : vector<8x256xf32>
    %c1_7 = arith.constant 1 : index
    %13 = memref.load %arg3[%c1_7] : memref<12xf32, #tpu.memory_space<smem>>
    %14 = vector.broadcast %13 : f32 to vector<8x256xf32>
    %15 = arith.mulf %14, %6 : vector<8x256xf32>
    %16 = arith.addf %12, %15 : vector<8x256xf32>
    %17 = arith.mulf %16, %16 : vector<8x256xf32>
    %c1_8 = arith.constant 1 : index
    %18 = memref.load %arg4[%c1_8] : memref<6xf32, #tpu.memory_space<smem>>
    %c2 = arith.constant 2 : index
    %19 = memref.load %arg3[%c2] : memref<12xf32, #tpu.memory_space<smem>>
    %20 = vector.broadcast %19 : f32 to vector<8x256xf32>
    %21 = arith.mulf %20, %4 : vector<8x256xf32>
    %22 = vector.broadcast %18 : f32 to vector<8x256xf32>
    %23 = arith.addf %22, %21 : vector<8x256xf32>
    %c3 = arith.constant 3 : index
    %24 = memref.load %arg3[%c3] : memref<12xf32, #tpu.memory_space<smem>>
    %25 = vector.broadcast %24 : f32 to vector<8x256xf32>
    %26 = arith.mulf %25, %6 : vector<8x256xf32>
    %27 = arith.addf %23, %26 : vector<8x256xf32>
    %28 = arith.mulf %27, %27 : vector<8x256xf32>
    %29 = arith.addf %17, %28 : vector<8x256xf32>
    %c0_9 = arith.constant 0 : index
    %30 = memref.load %arg5[%c0_9] : memref<3xf32, #tpu.memory_space<smem>>
    %31 = vector.broadcast %30 : f32 to vector<8x256xf32>
    %32 = arith.subf %31, %29 : vector<8x256xf32>
    %c2_10 = arith.constant 2 : index
    %33 = memref.load %arg4[%c2_10] : memref<6xf32, #tpu.memory_space<smem>>
    %c4 = arith.constant 4 : index
    %34 = memref.load %arg3[%c4] : memref<12xf32, #tpu.memory_space<smem>>
    %35 = vector.broadcast %34 : f32 to vector<8x256xf32>
    %36 = arith.mulf %35, %4 : vector<8x256xf32>
    %37 = vector.broadcast %33 : f32 to vector<8x256xf32>
    %38 = arith.addf %37, %36 : vector<8x256xf32>
    %c5 = arith.constant 5 : index
    %39 = memref.load %arg3[%c5] : memref<12xf32, #tpu.memory_space<smem>>
    %40 = vector.broadcast %39 : f32 to vector<8x256xf32>
    %41 = arith.mulf %40, %6 : vector<8x256xf32>
    %42 = arith.addf %38, %41 : vector<8x256xf32>
    %43 = arith.mulf %42, %42 : vector<8x256xf32>
    %c3_11 = arith.constant 3 : index
    %44 = memref.load %arg4[%c3_11] : memref<6xf32, #tpu.memory_space<smem>>
    %c6 = arith.constant 6 : index
    %45 = memref.load %arg3[%c6] : memref<12xf32, #tpu.memory_space<smem>>
    %46 = vector.broadcast %45 : f32 to vector<8x256xf32>
    %47 = arith.mulf %46, %4 : vector<8x256xf32>
    %48 = vector.broadcast %44 : f32 to vector<8x256xf32>
    %49 = arith.addf %48, %47 : vector<8x256xf32>
    %c7 = arith.constant 7 : index
    %50 = memref.load %arg3[%c7] : memref<12xf32, #tpu.memory_space<smem>>
    %51 = vector.broadcast %50 : f32 to vector<8x256xf32>
    %52 = arith.mulf %51, %6 : vector<8x256xf32>
    %53 = arith.addf %49, %52 : vector<8x256xf32>
    %54 = arith.mulf %53, %53 : vector<8x256xf32>
    %55 = arith.addf %43, %54 : vector<8x256xf32>
    %c1_12 = arith.constant 1 : index
    %56 = memref.load %arg5[%c1_12] : memref<3xf32, #tpu.memory_space<smem>>
    %57 = vector.broadcast %56 : f32 to vector<8x256xf32>
    %58 = arith.subf %57, %55 : vector<8x256xf32>
    %c4_13 = arith.constant 4 : index
    %59 = memref.load %arg4[%c4_13] : memref<6xf32, #tpu.memory_space<smem>>
    %c8 = arith.constant 8 : index
    %60 = memref.load %arg3[%c8] : memref<12xf32, #tpu.memory_space<smem>>
    %61 = vector.broadcast %60 : f32 to vector<8x256xf32>
    %62 = arith.mulf %61, %4 : vector<8x256xf32>
    %63 = vector.broadcast %59 : f32 to vector<8x256xf32>
    %64 = arith.addf %63, %62 : vector<8x256xf32>
    %c9 = arith.constant 9 : index
    %65 = memref.load %arg3[%c9] : memref<12xf32, #tpu.memory_space<smem>>
    %66 = vector.broadcast %65 : f32 to vector<8x256xf32>
    %67 = arith.mulf %66, %6 : vector<8x256xf32>
    %68 = arith.addf %64, %67 : vector<8x256xf32>
    %69 = arith.mulf %68, %68 : vector<8x256xf32>
    %c5_14 = arith.constant 5 : index
    %70 = memref.load %arg4[%c5_14] : memref<6xf32, #tpu.memory_space<smem>>
    %c10 = arith.constant 10 : index
    %71 = memref.load %arg3[%c10] : memref<12xf32, #tpu.memory_space<smem>>
    %72 = vector.broadcast %71 : f32 to vector<8x256xf32>
    %73 = arith.mulf %72, %4 : vector<8x256xf32>
    %74 = vector.broadcast %70 : f32 to vector<8x256xf32>
    %75 = arith.addf %74, %73 : vector<8x256xf32>
    %c11 = arith.constant 11 : index
    %76 = memref.load %arg3[%c11] : memref<12xf32, #tpu.memory_space<smem>>
    %77 = vector.broadcast %76 : f32 to vector<8x256xf32>
    %78 = arith.mulf %77, %6 : vector<8x256xf32>
    %79 = arith.addf %75, %78 : vector<8x256xf32>
    %80 = arith.mulf %79, %79 : vector<8x256xf32>
    %81 = arith.addf %69, %80 : vector<8x256xf32>
    %c2_15 = arith.constant 2 : index
    %82 = memref.load %arg5[%c2_15] : memref<3xf32, #tpu.memory_space<smem>>
    %83 = vector.broadcast %82 : f32 to vector<8x256xf32>
    %84 = arith.subf %83, %81 : vector<8x256xf32>
    %85 = arith.maximumf %32, %58 : vector<8x256xf32>
    %86 = arith.maximumf %85, %84 : vector<8x256xf32>
    %87 = arith.subf %32, %86 : vector<8x256xf32>
    %88 = math.exp %87 : vector<8x256xf32>
    %89 = arith.subf %58, %86 : vector<8x256xf32>
    %90 = math.exp %89 : vector<8x256xf32>
    %91 = arith.addf %88, %90 : vector<8x256xf32>
    %92 = arith.subf %84, %86 : vector<8x256xf32>
    %93 = math.exp %92 : vector<8x256xf32>
    %94 = arith.addf %91, %93 : vector<8x256xf32>
    %95 = math.log %94 : vector<8x256xf32>
    %96 = arith.addf %86, %95 : vector<8x256xf32>
    %c0_16 = arith.constant 0 : index
    %c0_17 = arith.constant 0 : index
    %c0_18 = arith.constant 0 : index
    %97 = vector.load %arg6[%c0_16, %c0_17, %c0_18] : memref<1x8x1280xf32, #tpu.memory_space<vmem>>, vector<1x8x256xf32>
    %98 = arith.mulf %96, %96 : vector<8x256xf32>
    %99 = vector.shape_cast %98 : vector<8x256xf32> to vector<1x8x256xf32>
    %100 = arith.addf %97, %99 : vector<1x8x256xf32>
    %c0_19 = arith.constant 0 : index
    %c0_20 = arith.constant 0 : index
    %c0_21 = arith.constant 0 : index
    %101 = vector.load %arg6[%c0_19, %c0_20, %c0_21] : memref<1x8x1280xf32, #tpu.memory_space<vmem>>, vector<1x8x256xf32>
    tpu.vector_store %arg6[%c0_19, %c0_20, %c0_21], %100 {strides = array<i32>} : memref<1x8x1280xf32, #tpu.memory_space<vmem>>, vector<1x8x256xf32>,
    %c0_22 = arith.constant 0 : index
    %c0_23 = arith.constant 0 : index
    %c256 = arith.constant 256 : index
    %102 = vector.load %arg2[%c0_22, %c0_23, %c256] : memref<2x8x1280xf32, #tpu.memory_space<vmem>>, vector<1x8x256xf32>
    %103 = vector.shape_cast %102 : vector<1x8x256xf32> to vector<8x256xf32>
    %c1_24 = arith.constant 1 : index
    %c0_25 = arith.constant 0 : index
    %c256_26 = arith.constant 256 : index
    %104 = vector.load %arg2[%c1_24, %c0_25, %c256_26] : memref<2x8x1280xf32, #tpu.memory_space<vmem>>, vector<1x8x256xf32>
    %105 = vector.shape_cast %104 : vector<1x8x256xf32> to vector<8x256xf32>
    %c0_27 = arith.constant 0 : index
    %106 = memref.load %arg4[%c0_27] : memref<6xf32, #tpu.memory_space<smem>>
    %c0_28 = arith.constant 0 : index
    %107 = memref.load %arg3[%c0_28] : memref<12xf32, #tpu.memory_space<smem>>
    %108 = vector.broadcast %107 : f32 to vector<8x256xf32>
    %109 = arith.mulf %108, %103 : vector<8x256xf32>
    %110 = vector.broadcast %106 : f32 to vector<8x256xf32>
    %111 = arith.addf %110, %109 : vector<8x256xf32>
    %c1_29 = arith.constant 1 : index
    %112 = memref.load %arg3[%c1_29] : memref<12xf32, #tpu.memory_space<smem>>
    %113 = vector.broadcast %112 : f32 to vector<8x256xf32>
    %114 = arith.mulf %113, %105 : vector<8x256xf32>
    %115 = arith.addf %111, %114 : vector<8x256xf32>
    %116 = arith.mulf %115, %115 : vector<8x256xf32>
    %c1_30 = arith.constant 1 : index
    %117 = memref.load %arg4[%c1_30] : memref<6xf32, #tpu.memory_space<smem>>
    %c2_31 = arith.constant 2 : index
    %118 = memref.load %arg3[%c2_31] : memref<12xf32, #tpu.memory_space<smem>>
    %119 = vector.broadcast %118 : f32 to vector<8x256xf32>
    %120 = arith.mulf %119, %103 : vector<8x256xf32>
    %121 = vector.broadcast %117 : f32 to vector<8x256xf32>
    %122 = arith.addf %121, %120 : vector<8x256xf32>
    %c3_32 = arith.constant 3 : index
    %123 = memref.load %arg3[%c3_32] : memref<12xf32, #tpu.memory_space<smem>>
    %124 = vector.broadcast %123 : f32 to vector<8x256xf32>
    %125 = arith.mulf %124, %105 : vector<8x256xf32>
    %126 = arith.addf %122, %125 : vector<8x256xf32>
    %127 = arith.mulf %126, %126 : vector<8x256xf32>
    %128 = arith.addf %116, %127 : vector<8x256xf32>
    %c0_33 = arith.constant 0 : index
    %129 = memref.load %arg5[%c0_33] : memref<3xf32, #tpu.memory_space<smem>>
    %130 = vector.broadcast %129 : f32 to vector<8x256xf32>
    %131 = arith.subf %130, %128 : vector<8x256xf32>
    %c2_34 = arith.constant 2 : index
    %132 = memref.load %arg4[%c2_34] : memref<6xf32, #tpu.memory_space<smem>>
    %c4_35 = arith.constant 4 : index
    %133 = memref.load %arg3[%c4_35] : memref<12xf32, #tpu.memory_space<smem>>
    %134 = vector.broadcast %133 : f32 to vector<8x256xf32>
    %135 = arith.mulf %134, %103 : vector<8x256xf32>
    %136 = vector.broadcast %132 : f32 to vector<8x256xf32>
    %137 = arith.addf %136, %135 : vector<8x256xf32>
    %c5_36 = arith.constant 5 : index
    %138 = memref.load %arg3[%c5_36] : memref<12xf32, #tpu.memory_space<smem>>
    %139 = vector.broadcast %138 : f32 to vector<8x256xf32>
    %140 = arith.mulf %139, %105 : vector<8x256xf32>
    %141 = arith.addf %137, %140 : vector<8x256xf32>
    %142 = arith.mulf %141, %141 : vector<8x256xf32>
    %c3_37 = arith.constant 3 : index
    %143 = memref.load %arg4[%c3_37] : memref<6xf32, #tpu.memory_space<smem>>
    %c6_38 = arith.constant 6 : index
    %144 = memref.load %arg3[%c6_38] : memref<12xf32, #tpu.memory_space<smem>>
    %145 = vector.broadcast %144 : f32 to vector<8x256xf32>
    %146 = arith.mulf %145, %103 : vector<8x256xf32>
    %147 = vector.broadcast %143 : f32 to vector<8x256xf32>
    %148 = arith.addf %147, %146 : vector<8x256xf32>
    %c7_39 = arith.constant 7 : index
    %149 = memref.load %arg3[%c7_39] : memref<12xf32, #tpu.memory_space<smem>>
    %150 = vector.broadcast %149 : f32 to vector<8x256xf32>
    %151 = arith.mulf %150, %105 : vector<8x256xf32>
    %152 = arith.addf %148, %151 : vector<8x256xf32>
    %153 = arith.mulf %152, %152 : vector<8x256xf32>
    %154 = arith.addf %142, %153 : vector<8x256xf32>
    %c1_40 = arith.constant 1 : index
    %155 = memref.load %arg5[%c1_40] : memref<3xf32, #tpu.memory_space<smem>>
    %156 = vector.broadcast %155 : f32 to vector<8x256xf32>
    %157 = arith.subf %156, %154 : vector<8x256xf32>
    %c4_41 = arith.constant 4 : index
    %158 = memref.load %arg4[%c4_41] : memref<6xf32, #tpu.memory_space<smem>>
    %c8_42 = arith.constant 8 : index
    %159 = memref.load %arg3[%c8_42] : memref<12xf32, #tpu.memory_space<smem>>
    %160 = vector.broadcast %159 : f32 to vector<8x256xf32>
    %161 = arith.mulf %160, %103 : vector<8x256xf32>
    %162 = vector.broadcast %158 : f32 to vector<8x256xf32>
    %163 = arith.addf %162, %161 : vector<8x256xf32>
    %c9_43 = arith.constant 9 : index
    %164 = memref.load %arg3[%c9_43] : memref<12xf32, #tpu.memory_space<smem>>
    %165 = vector.broadcast %164 : f32 to vector<8x256xf32>
    %166 = arith.mulf %165, %105 : vector<8x256xf32>
    %167 = arith.addf %163, %166 : vector<8x256xf32>
    %168 = arith.mulf %167, %167 : vector<8x256xf32>
    %c5_44 = arith.constant 5 : index
    %169 = memref.load %arg4[%c5_44] : memref<6xf32, #tpu.memory_space<smem>>
    %c10_45 = arith.constant 10 : index
    %170 = memref.load %arg3[%c10_45] : memref<12xf32, #tpu.memory_space<smem>>
    %171 = vector.broadcast %170 : f32 to vector<8x256xf32>
    %172 = arith.mulf %171, %103 : vector<8x256xf32>
    %173 = vector.broadcast %169 : f32 to vector<8x256xf32>
    %174 = arith.addf %173, %172 : vector<8x256xf32>
    %c11_46 = arith.constant 11 : index
    %175 = memref.load %arg3[%c11_46] : memref<12xf32, #tpu.memory_space<smem>>
    %176 = vector.broadcast %175 : f32 to vector<8x256xf32>
    %177 = arith.mulf %176, %105 : vector<8x256xf32>
    %178 = arith.addf %174, %177 : vector<8x256xf32>
    %179 = arith.mulf %178, %178 : vector<8x256xf32>
    %180 = arith.addf %168, %179 : vector<8x256xf32>
    %c2_47 = arith.constant 2 : index
    %181 = memref.load %arg5[%c2_47] : memref<3xf32, #tpu.memory_space<smem>>
    %182 = vector.broadcast %181 : f32 to vector<8x256xf32>
    %183 = arith.subf %182, %180 : vector<8x256xf32>
    %184 = arith.maximumf %131, %157 : vector<8x256xf32>
    %185 = arith.maximumf %184, %183 : vector<8x256xf32>
    %186 = arith.subf %131, %185 : vector<8x256xf32>
    %187 = math.exp %186 : vector<8x256xf32>
    %188 = arith.subf %157, %185 : vector<8x256xf32>
    %189 = math.exp %188 : vector<8x256xf32>
    %190 = arith.addf %187, %189 : vector<8x256xf32>
    %191 = arith.subf %183, %185 : vector<8x256xf32>
    %192 = math.exp %191 : vector<8x256xf32>
    %193 = arith.addf %190, %192 : vector<8x256xf32>
    %194 = math.log %193 : vector<8x256xf32>
    %195 = arith.addf %185, %194 : vector<8x256xf32>
    %c0_48 = arith.constant 0 : index
    %c0_49 = arith.constant 0 : index
    %c256_50 = arith.constant 256 : index
    %196 = vector.load %arg6[%c0_48, %c0_49, %c256_50] : memref<1x8x1280xf32, #tpu.memory_space<vmem>>, vector<1x8x256xf32>
    %197 = arith.mulf %195, %195 : vector<8x256xf32>
    %198 = vector.shape_cast %197 : vector<8x256xf32> to vector<1x8x256xf32>
    %199 = arith.addf %196, %198 : vector<1x8x256xf32>
    %c0_51 = arith.constant 0 : index
    %c0_52 = arith.constant 0 : index
    %c256_53 = arith.constant 256 : index
    %200 = vector.load %arg6[%c0_51, %c0_52, %c256_53] : memref<1x8x1280xf32, #tpu.memory_space<vmem>>, vector<1x8x256xf32>
    tpu.vector_store %arg6[%c0_51, %c0_52, %c256_53], %199 {strides = array<i32>} : memref<1x8x1280xf32, #tpu.memory_space<vmem>>, vector<1x8x256xf32>,
    %c0_54 = arith.constant 0 : index
    %c0_55 = arith.constant 0 : index
    %c512 = arith.constant 512 : index
    %201 = vector.load %arg2[%c0_54, %c0_55, %c512] : memref<2x8x1280xf32, #tpu.memory_space<vmem>>, vector<1x8x256xf32>
    %202 = vector.shape_cast %201 : vector<1x8x256xf32> to vector<8x256xf32>
    %c1_56 = arith.constant 1 : index
    %c0_57 = arith.constant 0 : index
    %c512_58 = arith.constant 512 : index
    %203 = vector.load %arg2[%c1_56, %c0_57, %c512_58] : memref<2x8x1280xf32, #tpu.memory_space<vmem>>, vector<1x8x256xf32>
    %204 = vector.shape_cast %203 : vector<1x8x256xf32> to vector<8x256xf32>
    %c0_59 = arith.constant 0 : index
    %205 = memref.load %arg4[%c0_59] : memref<6xf32, #tpu.memory_space<smem>>
    %c0_60 = arith.constant 0 : index
    %206 = memref.load %arg3[%c0_60] : memref<12xf32, #tpu.memory_space<smem>>
    %207 = vector.broadcast %206 : f32 to vector<8x256xf32>
    %208 = arith.mulf %207, %202 : vector<8x256xf32>
    %209 = vector.broadcast %205 : f32 to vector<8x256xf32>
    %210 = arith.addf %209, %208 : vector<8x256xf32>
    %c1_61 = arith.constant 1 : index
    %211 = memref.load %arg3[%c1_61] : memref<12xf32, #tpu.memory_space<smem>>
    %212 = vector.broadcast %211 : f32 to vector<8x256xf32>
    %213 = arith.mulf %212, %204 : vector<8x256xf32>
    %214 = arith.addf %210, %213 : vector<8x256xf32>
    %215 = arith.mulf %214, %214 : vector<8x256xf32>
    %c1_62 = arith.constant 1 : index
    %216 = memref.load %arg4[%c1_62] : memref<6xf32, #tpu.memory_space<smem>>
    %c2_63 = arith.constant 2 : index
    %217 = memref.load %arg3[%c2_63] : memref<12xf32, #tpu.memory_space<smem>>
    %218 = vector.broadcast %217 : f32 to vector<8x256xf32>
    %219 = arith.mulf %218, %202 : vector<8x256xf32>
    %220 = vector.broadcast %216 : f32 to vector<8x256xf32>
    %221 = arith.addf %220, %219 : vector<8x256xf32>
    %c3_64 = arith.constant 3 : index
    %222 = memref.load %arg3[%c3_64] : memref<12xf32, #tpu.memory_space<smem>>
    %223 = vector.broadcast %222 : f32 to vector<8x256xf32>
    %224 = arith.mulf %223, %204 : vector<8x256xf32>
    %225 = arith.addf %221, %224 : vector<8x256xf32>
    %226 = arith.mulf %225, %225 : vector<8x256xf32>
    %227 = arith.addf %215, %226 : vector<8x256xf32>
    %c0_65 = arith.constant 0 : index
    %228 = memref.load %arg5[%c0_65] : memref<3xf32, #tpu.memory_space<smem>>
    %229 = vector.broadcast %228 : f32 to vector<8x256xf32>
    %230 = arith.subf %229, %227 : vector<8x256xf32>
    %c2_66 = arith.constant 2 : index
    %231 = memref.load %arg4[%c2_66] : memref<6xf32, #tpu.memory_space<smem>>
    %c4_67 = arith.constant 4 : index
    %232 = memref.load %arg3[%c4_67] : memref<12xf32, #tpu.memory_space<smem>>
    %233 = vector.broadcast %232 : f32 to vector<8x256xf32>
    %234 = arith.mulf %233, %202 : vector<8x256xf32>
    %235 = vector.broadcast %231 : f32 to vector<8x256xf32>
    %236 = arith.addf %235, %234 : vector<8x256xf32>
    %c5_68 = arith.constant 5 : index
    %237 = memref.load %arg3[%c5_68] : memref<12xf32, #tpu.memory_space<smem>>
    %238 = vector.broadcast %237 : f32 to vector<8x256xf32>
    %239 = arith.mulf %238, %204 : vector<8x256xf32>
    %240 = arith.addf %236, %239 : vector<8x256xf32>
    %241 = arith.mulf %240, %240 : vector<8x256xf32>
    %c3_69 = arith.constant 3 : index
    %242 = memref.load %arg4[%c3_69] : memref<6xf32, #tpu.memory_space<smem>>
    %c6_70 = arith.constant 6 : index
    %243 = memref.load %arg3[%c6_70] : memref<12xf32, #tpu.memory_space<smem>>
    %244 = vector.broadcast %243 : f32 to vector<8x256xf32>
    %245 = arith.mulf %244, %202 : vector<8x256xf32>
    %246 = vector.broadcast %242 : f32 to vector<8x256xf32>
    %247 = arith.addf %246, %245 : vector<8x256xf32>
    %c7_71 = arith.constant 7 : index
    %248 = memref.load %arg3[%c7_71] : memref<12xf32, #tpu.memory_space<smem>>
    %249 = vector.broadcast %248 : f32 to vector<8x256xf32>
    %250 = arith.mulf %249, %204 : vector<8x256xf32>
    %251 = arith.addf %247, %250 : vector<8x256xf32>
    %252 = arith.mulf %251, %251 : vector<8x256xf32>
    %253 = arith.addf %241, %252 : vector<8x256xf32>
    %c1_72 = arith.constant 1 : index
    %254 = memref.load %arg5[%c1_72] : memref<3xf32, #tpu.memory_space<smem>>
    %255 = vector.broadcast %254 : f32 to vector<8x256xf32>
    %256 = arith.subf %255, %253 : vector<8x256xf32>
    %c4_73 = arith.constant 4 : index
    %257 = memref.load %arg4[%c4_73] : memref<6xf32, #tpu.memory_space<smem>>
    %c8_74 = arith.constant 8 : index
    %258 = memref.load %arg3[%c8_74] : memref<12xf32, #tpu.memory_space<smem>>
    %259 = vector.broadcast %258 : f32 to vector<8x256xf32>
    %260 = arith.mulf %259, %202 : vector<8x256xf32>
    %261 = vector.broadcast %257 : f32 to vector<8x256xf32>
    %262 = arith.addf %261, %260 : vector<8x256xf32>
    %c9_75 = arith.constant 9 : index
    %263 = memref.load %arg3[%c9_75] : memref<12xf32, #tpu.memory_space<smem>>
    %264 = vector.broadcast %263 : f32 to vector<8x256xf32>
    %265 = arith.mulf %264, %204 : vector<8x256xf32>
    %266 = arith.addf %262, %265 : vector<8x256xf32>
    %267 = arith.mulf %266, %266 : vector<8x256xf32>
    %c5_76 = arith.constant 5 : index
    %268 = memref.load %arg4[%c5_76] : memref<6xf32, #tpu.memory_space<smem>>
    %c10_77 = arith.constant 10 : index
    %269 = memref.load %arg3[%c10_77] : memref<12xf32, #tpu.memory_space<smem>>
    %270 = vector.broadcast %269 : f32 to vector<8x256xf32>
    %271 = arith.mulf %270, %202 : vector<8x256xf32>
    %272 = vector.broadcast %268 : f32 to vector<8x256xf32>
    %273 = arith.addf %272, %271 : vector<8x256xf32>
    %c11_78 = arith.constant 11 : index
    %274 = memref.load %arg3[%c11_78] : memref<12xf32, #tpu.memory_space<smem>>
    %275 = vector.broadcast %274 : f32 to vector<8x256xf32>
    %276 = arith.mulf %275, %204 : vector<8x256xf32>
    %277 = arith.addf %273, %276 : vector<8x256xf32>
    %278 = arith.mulf %277, %277 : vector<8x256xf32>
    %279 = arith.addf %267, %278 : vector<8x256xf32>
    %c2_79 = arith.constant 2 : index
    %280 = memref.load %arg5[%c2_79] : memref<3xf32, #tpu.memory_space<smem>>
    %281 = vector.broadcast %280 : f32 to vector<8x256xf32>
    %282 = arith.subf %281, %279 : vector<8x256xf32>
    %283 = arith.maximumf %230, %256 : vector<8x256xf32>
    %284 = arith.maximumf %283, %282 : vector<8x256xf32>
    %285 = arith.subf %230, %284 : vector<8x256xf32>
    %286 = math.exp %285 : vector<8x256xf32>
    %287 = arith.subf %256, %284 : vector<8x256xf32>
    %288 = math.exp %287 : vector<8x256xf32>
    %289 = arith.addf %286, %288 : vector<8x256xf32>
    %290 = arith.subf %282, %284 : vector<8x256xf32>
    %291 = math.exp %290 : vector<8x256xf32>
    %292 = arith.addf %289, %291 : vector<8x256xf32>
    %293 = math.log %292 : vector<8x256xf32>
    %294 = arith.addf %284, %293 : vector<8x256xf32>
    %c0_80 = arith.constant 0 : index
    %c0_81 = arith.constant 0 : index
    %c512_82 = arith.constant 512 : index
    %295 = vector.load %arg6[%c0_80, %c0_81, %c512_82] : memref<1x8x1280xf32, #tpu.memory_space<vmem>>, vector<1x8x256xf32>
    %296 = arith.mulf %294, %294 : vector<8x256xf32>
    %297 = vector.shape_cast %296 : vector<8x256xf32> to vector<1x8x256xf32>
    %298 = arith.addf %295, %297 : vector<1x8x256xf32>
    %c0_83 = arith.constant 0 : index
    %c0_84 = arith.constant 0 : index
    %c512_85 = arith.constant 512 : index
    %299 = vector.load %arg6[%c0_83, %c0_84, %c512_85] : memref<1x8x1280xf32, #tpu.memory_space<vmem>>, vector<1x8x256xf32>
    tpu.vector_store %arg6[%c0_83, %c0_84, %c512_85], %298 {strides = array<i32>} : memref<1x8x1280xf32, #tpu.memory_space<vmem>>, vector<1x8x256xf32>,
    %c0_86 = arith.constant 0 : index
    %c0_87 = arith.constant 0 : index
    %c768 = arith.constant 768 : index
    %300 = vector.load %arg2[%c0_86, %c0_87, %c768] : memref<2x8x1280xf32, #tpu.memory_space<vmem>>, vector<1x8x256xf32>
    %301 = vector.shape_cast %300 : vector<1x8x256xf32> to vector<8x256xf32>
    %c1_88 = arith.constant 1 : index
    %c0_89 = arith.constant 0 : index
    %c768_90 = arith.constant 768 : index
    %302 = vector.load %arg2[%c1_88, %c0_89, %c768_90] : memref<2x8x1280xf32, #tpu.memory_space<vmem>>, vector<1x8x256xf32>
    %303 = vector.shape_cast %302 : vector<1x8x256xf32> to vector<8x256xf32>
    %c0_91 = arith.constant 0 : index
    %304 = memref.load %arg4[%c0_91] : memref<6xf32, #tpu.memory_space<smem>>
    %c0_92 = arith.constant 0 : index
    %305 = memref.load %arg3[%c0_92] : memref<12xf32, #tpu.memory_space<smem>>
    %306 = vector.broadcast %305 : f32 to vector<8x256xf32>
    %307 = arith.mulf %306, %301 : vector<8x256xf32>
    %308 = vector.broadcast %304 : f32 to vector<8x256xf32>
    %309 = arith.addf %308, %307 : vector<8x256xf32>
    %c1_93 = arith.constant 1 : index
    %310 = memref.load %arg3[%c1_93] : memref<12xf32, #tpu.memory_space<smem>>
    %311 = vector.broadcast %310 : f32 to vector<8x256xf32>
    %312 = arith.mulf %311, %303 : vector<8x256xf32>
    %313 = arith.addf %309, %312 : vector<8x256xf32>
    %314 = arith.mulf %313, %313 : vector<8x256xf32>
    %c1_94 = arith.constant 1 : index
    %315 = memref.load %arg4[%c1_94] : memref<6xf32, #tpu.memory_space<smem>>
    %c2_95 = arith.constant 2 : index
    %316 = memref.load %arg3[%c2_95] : memref<12xf32, #tpu.memory_space<smem>>
    %317 = vector.broadcast %316 : f32 to vector<8x256xf32>
    %318 = arith.mulf %317, %301 : vector<8x256xf32>
    %319 = vector.broadcast %315 : f32 to vector<8x256xf32>
    %320 = arith.addf %319, %318 : vector<8x256xf32>
    %c3_96 = arith.constant 3 : index
    %321 = memref.load %arg3[%c3_96] : memref<12xf32, #tpu.memory_space<smem>>
    %322 = vector.broadcast %321 : f32 to vector<8x256xf32>
    %323 = arith.mulf %322, %303 : vector<8x256xf32>
    %324 = arith.addf %320, %323 : vector<8x256xf32>
    %325 = arith.mulf %324, %324 : vector<8x256xf32>
    %326 = arith.addf %314, %325 : vector<8x256xf32>
    %c0_97 = arith.constant 0 : index
    %327 = memref.load %arg5[%c0_97] : memref<3xf32, #tpu.memory_space<smem>>
    %328 = vector.broadcast %327 : f32 to vector<8x256xf32>
    %329 = arith.subf %328, %326 : vector<8x256xf32>
    %c2_98 = arith.constant 2 : index
    %330 = memref.load %arg4[%c2_98] : memref<6xf32, #tpu.memory_space<smem>>
    %c4_99 = arith.constant 4 : index
    %331 = memref.load %arg3[%c4_99] : memref<12xf32, #tpu.memory_space<smem>>
    %332 = vector.broadcast %331 : f32 to vector<8x256xf32>
    %333 = arith.mulf %332, %301 : vector<8x256xf32>
    %334 = vector.broadcast %330 : f32 to vector<8x256xf32>
    %335 = arith.addf %334, %333 : vector<8x256xf32>
    %c5_100 = arith.constant 5 : index
    %336 = memref.load %arg3[%c5_100] : memref<12xf32, #tpu.memory_space<smem>>
    %337 = vector.broadcast %336 : f32 to vector<8x256xf32>
    %338 = arith.mulf %337, %303 : vector<8x256xf32>
    %339 = arith.addf %335, %338 : vector<8x256xf32>
    %340 = arith.mulf %339, %339 : vector<8x256xf32>
    %c3_101 = arith.constant 3 : index
    %341 = memref.load %arg4[%c3_101] : memref<6xf32, #tpu.memory_space<smem>>
    %c6_102 = arith.constant 6 : index
    %342 = memref.load %arg3[%c6_102] : memref<12xf32, #tpu.memory_space<smem>>
    %343 = vector.broadcast %342 : f32 to vector<8x256xf32>
    %344 = arith.mulf %343, %301 : vector<8x256xf32>
    %345 = vector.broadcast %341 : f32 to vector<8x256xf32>
    %346 = arith.addf %345, %344 : vector<8x256xf32>
    %c7_103 = arith.constant 7 : index
    %347 = memref.load %arg3[%c7_103] : memref<12xf32, #tpu.memory_space<smem>>
    %348 = vector.broadcast %347 : f32 to vector<8x256xf32>
    %349 = arith.mulf %348, %303 : vector<8x256xf32>
    %350 = arith.addf %346, %349 : vector<8x256xf32>
    %351 = arith.mulf %350, %350 : vector<8x256xf32>
    %352 = arith.addf %340, %351 : vector<8x256xf32>
    %c1_104 = arith.constant 1 : index
    %353 = memref.load %arg5[%c1_104] : memref<3xf32, #tpu.memory_space<smem>>
    %354 = vector.broadcast %353 : f32 to vector<8x256xf32>
    %355 = arith.subf %354, %352 : vector<8x256xf32>
    %c4_105 = arith.constant 4 : index
    %356 = memref.load %arg4[%c4_105] : memref<6xf32, #tpu.memory_space<smem>>
    %c8_106 = arith.constant 8 : index
    %357 = memref.load %arg3[%c8_106] : memref<12xf32, #tpu.memory_space<smem>>
    %358 = vector.broadcast %357 : f32 to vector<8x256xf32>
    %359 = arith.mulf %358, %301 : vector<8x256xf32>
    %360 = vector.broadcast %356 : f32 to vector<8x256xf32>
    %361 = arith.addf %360, %359 : vector<8x256xf32>
    %c9_107 = arith.constant 9 : index
    %362 = memref.load %arg3[%c9_107] : memref<12xf32, #tpu.memory_space<smem>>
    %363 = vector.broadcast %362 : f32 to vector<8x256xf32>
    %364 = arith.mulf %363, %303 : vector<8x256xf32>
    %365 = arith.addf %361, %364 : vector<8x256xf32>
    %366 = arith.mulf %365, %365 : vector<8x256xf32>
    %c5_108 = arith.constant 5 : index
    %367 = memref.load %arg4[%c5_108] : memref<6xf32, #tpu.memory_space<smem>>
    %c10_109 = arith.constant 10 : index
    %368 = memref.load %arg3[%c10_109] : memref<12xf32, #tpu.memory_space<smem>>
    %369 = vector.broadcast %368 : f32 to vector<8x256xf32>
    %370 = arith.mulf %369, %301 : vector<8x256xf32>
    %371 = vector.broadcast %367 : f32 to vector<8x256xf32>
    %372 = arith.addf %371, %370 : vector<8x256xf32>
    %c11_110 = arith.constant 11 : index
    %373 = memref.load %arg3[%c11_110] : memref<12xf32, #tpu.memory_space<smem>>
    %374 = vector.broadcast %373 : f32 to vector<8x256xf32>
    %375 = arith.mulf %374, %303 : vector<8x256xf32>
    %376 = arith.addf %372, %375 : vector<8x256xf32>
    %377 = arith.mulf %376, %376 : vector<8x256xf32>
    %378 = arith.addf %366, %377 : vector<8x256xf32>
    %c2_111 = arith.constant 2 : index
    %379 = memref.load %arg5[%c2_111] : memref<3xf32, #tpu.memory_space<smem>>
    %380 = vector.broadcast %379 : f32 to vector<8x256xf32>
    %381 = arith.subf %380, %378 : vector<8x256xf32>
    %382 = arith.maximumf %329, %355 : vector<8x256xf32>
    %383 = arith.maximumf %382, %381 : vector<8x256xf32>
    %384 = arith.subf %329, %383 : vector<8x256xf32>
    %385 = math.exp %384 : vector<8x256xf32>
    %386 = arith.subf %355, %383 : vector<8x256xf32>
    %387 = math.exp %386 : vector<8x256xf32>
    %388 = arith.addf %385, %387 : vector<8x256xf32>
    %389 = arith.subf %381, %383 : vector<8x256xf32>
    %390 = math.exp %389 : vector<8x256xf32>
    %391 = arith.addf %388, %390 : vector<8x256xf32>
    %392 = math.log %391 : vector<8x256xf32>
    %393 = arith.addf %383, %392 : vector<8x256xf32>
    %c0_112 = arith.constant 0 : index
    %c0_113 = arith.constant 0 : index
    %c768_114 = arith.constant 768 : index
    %394 = vector.load %arg6[%c0_112, %c0_113, %c768_114] : memref<1x8x1280xf32, #tpu.memory_space<vmem>>, vector<1x8x256xf32>
    %395 = arith.mulf %393, %393 : vector<8x256xf32>
    %396 = vector.shape_cast %395 : vector<8x256xf32> to vector<1x8x256xf32>
    %397 = arith.addf %394, %396 : vector<1x8x256xf32>
    %c0_115 = arith.constant 0 : index
    %c0_116 = arith.constant 0 : index
    %c768_117 = arith.constant 768 : index
    %398 = vector.load %arg6[%c0_115, %c0_116, %c768_117] : memref<1x8x1280xf32, #tpu.memory_space<vmem>>, vector<1x8x256xf32>
    tpu.vector_store %arg6[%c0_115, %c0_116, %c768_117], %397 {strides = array<i32>} : memref<1x8x1280xf32, #tpu.memory_space<vmem>>, vector<1x8x256xf32>,
    %c0_118 = arith.constant 0 : index
    %c0_119 = arith.constant 0 : index
    %c1024 = arith.constant 1024 : index
    %399 = vector.load %arg2[%c0_118, %c0_119, %c1024] : memref<2x8x1280xf32, #tpu.memory_space<vmem>>, vector<1x8x256xf32>
    %400 = vector.shape_cast %399 : vector<1x8x256xf32> to vector<8x256xf32>
    %c1_120 = arith.constant 1 : index
    %c0_121 = arith.constant 0 : index
    %c1024_122 = arith.constant 1024 : index
    %401 = vector.load %arg2[%c1_120, %c0_121, %c1024_122] : memref<2x8x1280xf32, #tpu.memory_space<vmem>>, vector<1x8x256xf32>
    %402 = vector.shape_cast %401 : vector<1x8x256xf32> to vector<8x256xf32>
    %c0_123 = arith.constant 0 : index
    %403 = memref.load %arg4[%c0_123] : memref<6xf32, #tpu.memory_space<smem>>
    %c0_124 = arith.constant 0 : index
    %404 = memref.load %arg3[%c0_124] : memref<12xf32, #tpu.memory_space<smem>>
    %405 = vector.broadcast %404 : f32 to vector<8x256xf32>
    %406 = arith.mulf %405, %400 : vector<8x256xf32>
    %407 = vector.broadcast %403 : f32 to vector<8x256xf32>
    %408 = arith.addf %407, %406 : vector<8x256xf32>
    %c1_125 = arith.constant 1 : index
    %409 = memref.load %arg3[%c1_125] : memref<12xf32, #tpu.memory_space<smem>>
    %410 = vector.broadcast %409 : f32 to vector<8x256xf32>
    %411 = arith.mulf %410, %402 : vector<8x256xf32>
    %412 = arith.addf %408, %411 : vector<8x256xf32>
    %413 = arith.mulf %412, %412 : vector<8x256xf32>
    %c1_126 = arith.constant 1 : index
    %414 = memref.load %arg4[%c1_126] : memref<6xf32, #tpu.memory_space<smem>>
    %c2_127 = arith.constant 2 : index
    %415 = memref.load %arg3[%c2_127] : memref<12xf32, #tpu.memory_space<smem>>
    %416 = vector.broadcast %415 : f32 to vector<8x256xf32>
    %417 = arith.mulf %416, %400 : vector<8x256xf32>
    %418 = vector.broadcast %414 : f32 to vector<8x256xf32>
    %419 = arith.addf %418, %417 : vector<8x256xf32>
    %c3_128 = arith.constant 3 : index
    %420 = memref.load %arg3[%c3_128] : memref<12xf32, #tpu.memory_space<smem>>
    %421 = vector.broadcast %420 : f32 to vector<8x256xf32>
    %422 = arith.mulf %421, %402 : vector<8x256xf32>
    %423 = arith.addf %419, %422 : vector<8x256xf32>
    %424 = arith.mulf %423, %423 : vector<8x256xf32>
    %425 = arith.addf %413, %424 : vector<8x256xf32>
    %c0_129 = arith.constant 0 : index
    %426 = memref.load %arg5[%c0_129] : memref<3xf32, #tpu.memory_space<smem>>
    %427 = vector.broadcast %426 : f32 to vector<8x256xf32>
    %428 = arith.subf %427, %425 : vector<8x256xf32>
    %c2_130 = arith.constant 2 : index
    %429 = memref.load %arg4[%c2_130] : memref<6xf32, #tpu.memory_space<smem>>
    %c4_131 = arith.constant 4 : index
    %430 = memref.load %arg3[%c4_131] : memref<12xf32, #tpu.memory_space<smem>>
    %431 = vector.broadcast %430 : f32 to vector<8x256xf32>
    %432 = arith.mulf %431, %400 : vector<8x256xf32>
    %433 = vector.broadcast %429 : f32 to vector<8x256xf32>
    %434 = arith.addf %433, %432 : vector<8x256xf32>
    %c5_132 = arith.constant 5 : index
    %435 = memref.load %arg3[%c5_132] : memref<12xf32, #tpu.memory_space<smem>>
    %436 = vector.broadcast %435 : f32 to vector<8x256xf32>
    %437 = arith.mulf %436, %402 : vector<8x256xf32>
    %438 = arith.addf %434, %437 : vector<8x256xf32>
    %439 = arith.mulf %438, %438 : vector<8x256xf32>
    %c3_133 = arith.constant 3 : index
    %440 = memref.load %arg4[%c3_133] : memref<6xf32, #tpu.memory_space<smem>>
    %c6_134 = arith.constant 6 : index
    %441 = memref.load %arg3[%c6_134] : memref<12xf32, #tpu.memory_space<smem>>
    %442 = vector.broadcast %441 : f32 to vector<8x256xf32>
    %443 = arith.mulf %442, %400 : vector<8x256xf32>
    %444 = vector.broadcast %440 : f32 to vector<8x256xf32>
    %445 = arith.addf %444, %443 : vector<8x256xf32>
    %c7_135 = arith.constant 7 : index
    %446 = memref.load %arg3[%c7_135] : memref<12xf32, #tpu.memory_space<smem>>
    %447 = vector.broadcast %446 : f32 to vector<8x256xf32>
    %448 = arith.mulf %447, %402 : vector<8x256xf32>
    %449 = arith.addf %445, %448 : vector<8x256xf32>
    %450 = arith.mulf %449, %449 : vector<8x256xf32>
    %451 = arith.addf %439, %450 : vector<8x256xf32>
    %c1_136 = arith.constant 1 : index
    %452 = memref.load %arg5[%c1_136] : memref<3xf32, #tpu.memory_space<smem>>
    %453 = vector.broadcast %452 : f32 to vector<8x256xf32>
    %454 = arith.subf %453, %451 : vector<8x256xf32>
    %c4_137 = arith.constant 4 : index
    %455 = memref.load %arg4[%c4_137] : memref<6xf32, #tpu.memory_space<smem>>
    %c8_138 = arith.constant 8 : index
    %456 = memref.load %arg3[%c8_138] : memref<12xf32, #tpu.memory_space<smem>>
    %457 = vector.broadcast %456 : f32 to vector<8x256xf32>
    %458 = arith.mulf %457, %400 : vector<8x256xf32>
    %459 = vector.broadcast %455 : f32 to vector<8x256xf32>
    %460 = arith.addf %459, %458 : vector<8x256xf32>
    %c9_139 = arith.constant 9 : index
    %461 = memref.load %arg3[%c9_139] : memref<12xf32, #tpu.memory_space<smem>>
    %462 = vector.broadcast %461 : f32 to vector<8x256xf32>
    %463 = arith.mulf %462, %402 : vector<8x256xf32>
    %464 = arith.addf %460, %463 : vector<8x256xf32>
    %465 = arith.mulf %464, %464 : vector<8x256xf32>
    %c5_140 = arith.constant 5 : index
    %466 = memref.load %arg4[%c5_140] : memref<6xf32, #tpu.memory_space<smem>>
    %c10_141 = arith.constant 10 : index
    %467 = memref.load %arg3[%c10_141] : memref<12xf32, #tpu.memory_space<smem>>
    %468 = vector.broadcast %467 : f32 to vector<8x256xf32>
    %469 = arith.mulf %468, %400 : vector<8x256xf32>
    %470 = vector.broadcast %466 : f32 to vector<8x256xf32>
    %471 = arith.addf %470, %469 : vector<8x256xf32>
    %c11_142 = arith.constant 11 : index
    %472 = memref.load %arg3[%c11_142] : memref<12xf32, #tpu.memory_space<smem>>
    %473 = vector.broadcast %472 : f32 to vector<8x256xf32>
    %474 = arith.mulf %473, %402 : vector<8x256xf32>
    %475 = arith.addf %471, %474 : vector<8x256xf32>
    %476 = arith.mulf %475, %475 : vector<8x256xf32>
    %477 = arith.addf %465, %476 : vector<8x256xf32>
    %c2_143 = arith.constant 2 : index
    %478 = memref.load %arg5[%c2_143] : memref<3xf32, #tpu.memory_space<smem>>
    %479 = vector.broadcast %478 : f32 to vector<8x256xf32>
    %480 = arith.subf %479, %477 : vector<8x256xf32>
    %481 = arith.maximumf %428, %454 : vector<8x256xf32>
    %482 = arith.maximumf %481, %480 : vector<8x256xf32>
    %483 = arith.subf %428, %482 : vector<8x256xf32>
    %484 = math.exp %483 : vector<8x256xf32>
    %485 = arith.subf %454, %482 : vector<8x256xf32>
    %486 = math.exp %485 : vector<8x256xf32>
    %487 = arith.addf %484, %486 : vector<8x256xf32>
    %488 = arith.subf %480, %482 : vector<8x256xf32>
    %489 = math.exp %488 : vector<8x256xf32>
    %490 = arith.addf %487, %489 : vector<8x256xf32>
    %491 = math.log %490 : vector<8x256xf32>
    %492 = arith.addf %482, %491 : vector<8x256xf32>
    %c0_144 = arith.constant 0 : index
    %c0_145 = arith.constant 0 : index
    %c1024_146 = arith.constant 1024 : index
    %493 = vector.load %arg6[%c0_144, %c0_145, %c1024_146] : memref<1x8x1280xf32, #tpu.memory_space<vmem>>, vector<1x8x256xf32>
    %494 = arith.mulf %492, %492 : vector<8x256xf32>
    %495 = vector.shape_cast %494 : vector<8x256xf32> to vector<1x8x256xf32>
    %496 = arith.addf %493, %495 : vector<1x8x256xf32>
    %c0_147 = arith.constant 0 : index
    %c0_148 = arith.constant 0 : index
    %c1024_149 = arith.constant 1024 : index
    %497 = vector.load %arg6[%c0_147, %c0_148, %c1024_149] : memref<1x8x1280xf32, #tpu.memory_space<vmem>>, vector<1x8x256xf32>
    tpu.vector_store %arg6[%c0_147, %c0_148, %c1024_149], %496 {strides = array<i32>} : memref<1x8x1280xf32, #tpu.memory_space<vmem>>, vector<1x8x256xf32>,
    return
  }
  func.func @transform_0(%arg0: i32, %arg1: i32) -> (i32, i32, i32) {
    %c1_i32 = arith.constant 1 : i32
    %0 = arith.muli %arg0, %c1_i32 : i32
    %1 = arith.addi %0, %arg1 : i32
    %c0_i32 = arith.constant 0 : i32
    %c0_i32_0 = arith.constant 0 : i32
    %c0_i32_1 = arith.constant 0 : i32
    return %c0_i32, %1, %c0_i32_0 : i32, i32, i32
  }
  func.func @transform_1(%arg0: i32, %arg1: i32) -> i32 {
    %c0_i32 = arith.constant 0 : i32
    %c0_i32_0 = arith.constant 0 : i32
    return %c0_i32 : i32
  }
  func.func @transform_2(%arg0: i32, %arg1: i32) -> i32 {
    %c0_i32 = arith.constant 0 : i32
    %c0_i32_0 = arith.constant 0 : i32
    return %c0_i32 : i32
  }
  func.func @transform_3(%arg0: i32, %arg1: i32) -> i32 {
    %c0_i32 = arith.constant 0 : i32
    %c0_i32_0 = arith.constant 0 : i32
    return %c0_i32 : i32
  }
  func.func @transform_4(%arg0: i32, %arg1: i32) -> (i32, i32, i32) {
    %c0_i32 = arith.constant 0 : i32
    %c0_i32_0 = arith.constant 0 : i32
    %c0_i32_1 = arith.constant 0 : i32
    return %arg0, %c0_i32, %c0_i32_0 : i32, i32, i32
  }
}

</mosaic_0001>

<llo_original>
// kernel: tpu_custom_call.1
$region0: #{tpu_custom_call.1}
  #allocation0 [shape = 'u32[]', space=smem, size = 0x4, offset = 0x4, fixed_abs, tag = 'smem constant byte address 0x4 - core index']
  #allocation1 [shape = 'u32[144,128]{1,0:T(1,128)}', space=vmem, size = 0x12000, scoped, tag = 'internal scratch']
  %s0 = inlined_call_operand.hbm [shape: f32[2,8,1280], index: 0, kind: input, shape index: {}]
  %s1 = inlined_call_operand.vmem [shape: f32[12], index: 1, kind: input, shape index: {}]
  %s2 = inlined_call_operand.vmem [shape: f32[6], index: 2, kind: input, shape index: {}]
  %s3 = inlined_call_operand.vmem [shape: f32[3], index: 3, kind: input, shape index: {}]
  %s4 = inlined_call_operand.hbm [shape: f32[1,8,1280], index: 4, kind: output, shape index: {}]
  %s5 = sld [smem:[#allocation0]]
  $region46: #{tpu_custom_call.1} parent=0
    _
  %s7 = ssub.s32 1, %s5
  %s8 = scalar_select 0, %s7, %s5
  $region1: #{tpu_custom_call.1} parent=0
    #allocation2 [shape = 'u8[81920]{0}', space=vmem, size = 0x14000, scoped, tag = 'input window, operand 0, single buffered']
    #allocation3 [shape = 's32[1]{0}', space=sflag, size = 0x4, scoped, tag = 'scoped memory for tpu_custom_call.1']
    #allocation4 [shape = 's32[1]{0}', space=sflag, size = 0x4, scoped, tag = 'scoped memory for tpu_custom_call.1']
    #allocation5 [shape = 's32[1]{0}', space=sflag, size = 0x4, scoped, tag = 'scoped memory for tpu_custom_call.1']
    #allocation6 [shape = 'u8[512]{0}', space=smem, size = 0x200, scoped, tag = 'input window, operand 1, single buffered']
    #allocation7 [shape = 'u8[512]{0}', space=smem, size = 0x200, scoped, tag = 'input window, operand 2, single buffered']
    #allocation8 [shape = 's32[1]{0}', space=sflag, size = 0x4, scoped, tag = 'scoped memory for tpu_custom_call.1']
    #allocation9 [shape = 'u8[512]{0}', space=smem, size = 0x200, scoped, tag = 'input window, operand 3, single buffered']
    #allocation10 [shape = 'u8[40960]{0}', space=vmem, size = 0xa000, scoped, tag = 'output window, operand 0, single buffered']
    %9 = vsyncpa [#allocation3], 0
    %10 = vsyncpa [#allocation5], 0
    %11 = vsyncpa [#allocation8], 0
    %12 = vsyncpa [#allocation4], 0
    // Predicated region
    $region2: #{tpu_custom_call.1} parent=1 // pred_check
      _
    $region3: #{tpu_custom_call.1} parent=1 // pred_check_branch
      %14 = sbr.rel (0) target = $region5
    $region4: #{tpu_custom_call.1} parent=1 // pred_region
      %s15 = sadd.s32 0, 0
      %s17 = ssub.s32 2560, 2560
      %18 = vsyncadd [#allocation3], %s17
      %s19 = smul.addr %s15, 10
      %s20 = smul.addr %s19, 128
      %s21 = scalar_lea.hbm %s0, %s20
      %s22 = sshll.u32 [#allocation2], 4
      %s23 = int_to_ptr.vmem [resolvable:$true] %s22
      %28 = dma.hbm_to_vmem [thread:$0]  %s21, 2560, %s23, [#allocation3], 1280, 1280, 80
    $region5: #{tpu_custom_call.1} parent=1 // pred_fallthru
      _
    // Predicated region
    $region6: #{tpu_custom_call.1} parent=1 // pred_check
      _
    $region7: #{tpu_custom_call.1} parent=1 // pred_check_branch
      %30 = sbr.rel (0) target = $region9
    $region8: #{tpu_custom_call.1} parent=1 // pred_region
      %s32 = ssub.s32 16, 16
      %33 = vsyncadd [#allocation5], %s32
      %s35 = sshll.u32 %s1, 4
      %s36 = int_to_ptr.vmem [resolvable:$true] %s35
      %38 = dma.vmem_to_smem %s36, 16, [#allocation6], [#allocation5]
    $region9: #{tpu_custom_call.1} parent=1 // pred_fallthru
      _
    // Predicated region
    $region10: #{tpu_custom_call.1} parent=1 // pred_check
      _
    $region11: #{tpu_custom_call.1} parent=1 // pred_check_branch
      %40 = sbr.rel (0) target = $region13
    $region12: #{tpu_custom_call.1} parent=1 // pred_region
      %s42 = ssub.s32 16, 16
      %43 = vsyncadd [#allocation8], %s42
      %s45 = sshll.u32 %s2, 4
      %s46 = int_to_ptr.vmem [resolvable:$true] %s45
      %48 = dma.vmem_to_smem %s46, 16, [#allocation7], [#allocation8]
    $region13: #{tpu_custom_call.1} parent=1 // pred_fallthru
      _
    // Predicated region
    $region14: #{tpu_custom_call.1} parent=1 // pred_check
      _
    $region15: #{tpu_custom_call.1} parent=1 // pred_check_branch
      %50 = sbr.rel (0) target = $region17
    $region16: #{tpu_custom_call.1} parent=1 // pred_region
      %s52 = ssub.s32 16, 16
      %53 = vsyncadd [#allocation8], %s52
      %s55 = sshll.u32 %s3, 4
      %s56 = int_to_ptr.vmem [resolvable:$true] %s55
      %58 = dma.vmem_to_smem %s56, 16, [#allocation9], [#allocation8]
    $region17: #{tpu_custom_call.1} parent=1 // pred_fallthru
      _
    // Predicated region
    $region18: #{tpu_custom_call.1} parent=1 // pred_check
      _
    $region19: #{tpu_custom_call.1} parent=1 // pred_check_branch
      %60 = sbr.rel (0) target = $region21
    $region20: #{tpu_custom_call.1} parent=1 // pred_region
      %61 = dma.done [#allocation3], 2560
    $region21: #{tpu_custom_call.1} parent=1 // pred_fallthru
      _
    // Predicated region
    $region22: #{tpu_custom_call.1} parent=1 // pred_check
      _
    $region23: #{tpu_custom_call.1} parent=1 // pred_check_branch
      %63 = sbr.rel (0) target = $region25
    $region24: #{tpu_custom_call.1} parent=1 // pred_region
      %64 = dma.done [#allocation5], 16
    $region25: #{tpu_custom_call.1} parent=1 // pred_fallthru
      _
    // Predicated region
    $region26: #{tpu_custom_call.1} parent=1 // pred_check
      _
    $region27: #{tpu_custom_call.1} parent=1 // pred_check_branch
      %66 = sbr.rel (0) target = $region29
    $region28: #{tpu_custom_call.1} parent=1 // pred_region
      %67 = dma.done [#allocation8], 16
    $region29: #{tpu_custom_call.1} parent=1 // pred_fallthru
      _
    // Predicated region
    $region30: #{tpu_custom_call.1} parent=1 // pred_check
      _
    $region31: #{tpu_custom_call.1} parent=1 // pred_check_branch
      %69 = sbr.rel (0) target = $region33
    $region32: #{tpu_custom_call.1} parent=1 // pred_region
      %70 = dma.done [#allocation8], 16
    $region33: #{tpu_custom_call.1} parent=1 // pred_fallthru
      _
    %71 = sfence
    %s72 = sadd.s32 0, 0
    %p73 = scmp.eq.s32.totalorder 0, 0
    // Predicated region
    $region34: #{tpu_custom_call.1} parent=1 // pred_check
      %p74 = pneg %p73
    $region35: #{tpu_custom_call.1} parent=1 // pred_check_branch
      %76 = sbr.rel (%p74) target = $region37
    $region36: #{tpu_custom_call.1} parent=1 // pred_region
      %77 = vst [vmem:[#allocation10] sm:$0xff] 0.0
      %78 = vst [vmem:[#allocation10 + $0x8] sm:$0xff] 0.0
      %79 = vst [vmem:[#allocation10 + $0x10] sm:$0xff] 0.0
      %80 = vst [vmem:[#allocation10 + $0x18] sm:$0xff] 0.0
      %81 = vst [vmem:[#allocation10 + $0x20] sm:$0xff] 0.0
      %82 = vst [vmem:[#allocation10 + $0x28] sm:$0xff] 0.0
      %83 = vst [vmem:[#allocation10 + $0x30] sm:$0xff] 0.0
      %84 = vst [vmem:[#allocation10 + $0x38] sm:$0xff] 0.0
      %85 = vst [vmem:[#allocation10 + $0x40] sm:$0xff] 0.0
      %86 = vst [vmem:[#allocation10 + $0x48] sm:$0xff] 0.0
    $region37: #{tpu_custom_call.1} parent=1 // pred_fallthru
      _
    %v87 = vld [vmem:[#allocation2] sm:$0xff]
    %v88 = vld [vmem:[#allocation2 + $0x8] sm:$0xff]
    %s89 = scalar_lea.vmem [#allocation2], 80
    %v90 = vld [vmem:[%s89] sm:$0xff]
    %v91 = vld [vmem:[%s89 + $0x8] sm:$0xff]
    %s92 = sld [smem:[#allocation7]]
    %s93 = sld [smem:[#allocation6]]
    %v94 = vstv %s93
    %v95 = vmul.f32 %v94, %v87
    %v96 = vmul.f32 %v94, %v88
    %v97 = vstv %s92
    %v98 = vadd.f32 %v97, %v95
    %v99 = vadd.f32 %v97, %v96
    %s100 = sld [smem:[#allocation6 + $0x1]]
    %v101 = vstv %s100
    %v102 = vmul.f32 %v101, %v90
    %v103 = vmul.f32 %v101, %v91
    %v104 = vadd.f32 %v98, %v102
    %v105 = vadd.f32 %v99, %v103
    %v106 = vmul.f32 %v104, %v104
    %v107 = vmul.f32 %v105, %v105
    %s108 = sld [smem:[#allocation7 + $0x1]]
    %s109 = sld [smem:[#allocation6 + $0x2]]
    %v110 = vstv %s109
    %v111 = vmul.f32 %v110, %v87
    %v112 = vmul.f32 %v110, %v88
    %v113 = vstv %s108
    %v114 = vadd.f32 %v113, %v111
    %v115 = vadd.f32 %v113, %v112
    %s116 = sld [smem:[#allocation6 + $0x3]]
    %v117 = vstv %s116
    %v118 = vmul.f32 %v117, %v90
    %v119 = vmul.f32 %v117, %v91
    %v120 = vadd.f32 %v114, %v118
    %v121 = vadd.f32 %v115, %v119
    %v122 = vmul.f32 %v120, %v120
    %v123 = vmul.f32 %v121, %v121
    %v124 = vadd.f32 %v106, %v122
    %v125 = vadd.f32 %v107, %v123
    %s126 = sld [smem:[#allocation9]]
    %v127 = vstv %s126
    %v128 = vsub.f32 %v127, %v124
    %v129 = vsub.f32 %v127, %v125
    %s130 = sld [smem:[#allocation7 + $0x2]]
    %s131 = sld [smem:[#allocation6 + $0x4]]
    %v132 = vstv %s131
    %v133 = vmul.f32 %v132, %v87
    %v134 = vmul.f32 %v132, %v88
    %v135 = vstv %s130
    %v136 = vadd.f32 %v135, %v133
    %v137 = vadd.f32 %v135, %v134
    %s138 = sld [smem:[#allocation6 + $0x5]]
    %v139 = vstv %s138
    %v140 = vmul.f32 %v139, %v90
    %v141 = vmul.f32 %v139, %v91
    %v142 = vadd.f32 %v136, %v140
    %v143 = vadd.f32 %v137, %v141
    %v144 = vmul.f32 %v142, %v142
    %v145 = vmul.f32 %v143, %v143
    %s146 = sld [smem:[#allocation7 + $0x3]]
    %s147 = sld [smem:[#allocation6 + $0x6]]
    %v148 = vstv %s147
    %v149 = vmul.f32 %v148, %v87
    %v150 = vmul.f32 %v148, %v88
    %v151 = vstv %s146
    %v152 = vadd.f32 %v151, %v149
    %v153 = vadd.f32 %v151, %v150
    %s154 = sld [smem:[#allocation6 + $0x7]]
    %v155 = vstv %s154
    %v156 = vmul.f32 %v155, %v90
    %v157 = vmul.f32 %v155, %v91
    %v158 = vadd.f32 %v152, %v156
    %v159 = vadd.f32 %v153, %v157
    %v160 = vmul.f32 %v158, %v158
    %v161 = vmul.f32 %v159, %v159
    %v162 = vadd.f32 %v144, %v160
    %v163 = vadd.f32 %v145, %v161
    %s164 = sld [smem:[#allocation9 + $0x1]]
    %v165 = vstv %s164
    %v166 = vsub.f32 %v165, %v162
    %v167 = vsub.f32 %v165, %v163
    %s168 = sld [smem:[#allocation7 + $0x4]]
    %s169 = sld [smem:[#allocation6 + $0x8]]
    %v170 = vstv %s169
    %v171 = vmul.f32 %v170, %v87
    %v172 = vmul.f32 %v170, %v88
    %v173 = vstv %s168
    %v174 = vadd.f32 %v173, %v171
    %v175 = vadd.f32 %v173, %v172
    %s176 = sld [smem:[#allocation6 + $0x9]]
    %v177 = vstv %s176
    %v178 = vmul.f32 %v177, %v90
    %v179 = vmul.f32 %v177, %v91
    %v180 = vadd.f32 %v174, %v178
    %v181 = vadd.f32 %v175, %v179
    %v182 = vmul.f32 %v180, %v180
    %v183 = vmul.f32 %v181, %v181
    %s184 = sld [smem:[#allocation7 + $0x5]]
    %s185 = sld [smem:[#allocation6 + $0xa]]
    %v186 = vstv %s185
    %v187 = vmul.f32 %v186, %v87
    %v188 = vmul.f32 %v186, %v88
    %v189 = vstv %s184
    %v190 = vadd.f32 %v189, %v187
    %v191 = vadd.f32 %v189, %v188
    %s192 = sld [smem:[#allocation6 + $0xb]]
    %v193 = vstv %s192
    %v194 = vmul.f32 %v193, %v90
    %v195 = vmul.f32 %v193, %v91
    %v196 = vadd.f32 %v190, %v194
    %v197 = vadd.f32 %v191, %v195
    %v198 = vmul.f32 %v196, %v196
    %v199 = vmul.f32 %v197, %v197
    %v200 = vadd.f32 %v182, %v198
    %v201 = vadd.f32 %v183, %v199
    %s202 = sld [smem:[#allocation9 + $0x2]]
    %v203 = vstv %s202
    %v204 = vsub.f32 %v203, %v200
    %v205 = vsub.f32 %v203, %v201
    %v206 = vmax.f32 %v128, %v166
    %v207 = vmax.f32 %v129, %v167
    %v208 = vmax.f32 %v206, %v204
    %v209 = vmax.f32 %v207, %v205
    %v210 = vsub.f32 %v128, %v208
    %v211 = vsub.f32 %v129, %v209
    %v212 = vmul.f32 %v210, 1.442695
    %v213 = vpow.pop %v212
    %v214 = vmul.f32 %v211, 1.442695
    %v215 = vpow.pop %v214
    %v216 = vsub.f32 %v166, %v208
    %v217 = vsub.f32 %v167, %v209
    %v218 = vmul.f32 %v216, 1.442695
    %v219 = vpow.pop %v218
    %v220 = vmul.f32 %v217, 1.442695
    %v221 = vpow.pop %v220
    %v222 = vadd.f32 %v213, %v219
    %v223 = vadd.f32 %v215, %v221
    %v224 = vsub.f32 %v204, %v208
    %v225 = vsub.f32 %v205, %v209
    %v226 = vmul.f32 %v224, 1.442695
    %v227 = vpow.pop %v226
    %v228 = vmul.f32 %v225, 1.442695
    %v229 = vpow.pop %v228
    %v230 = vadd.f32 %v222, %v227
    %v231 = vadd.f32 %v223, %v229
    %v232 = vlog2.pop %v230
    %v233 = vmul.f32 %v232, 0.6931472
    %v234 = vlog2.pop %v231
    %v235 = vmul.f32 %v234, 0.6931472
    %v236 = vadd.f32 %v208, %v233
    %v237 = vadd.f32 %v209, %v235
    %v238 = vld [vmem:[#allocation10] sm:$0xff]
    %v239 = vld [vmem:[#allocation10 + $0x8] sm:$0xff]
    %v240 = vmul.f32 %v236, %v236
    %v241 = vmul.f32 %v237, %v237
    %v242 = vadd.f32 %v238, %v240
    %v243 = vadd.f32 %v239, %v241
    %244 = vst [vmem:[#allocation10] sm:$0xff] %v242
    %245 = vst [vmem:[#allocation10 + $0x8] sm:$0xff] %v243
    %v246 = vld [vmem:[#allocation2 + $0x10] sm:$0xff]
    %v247 = vld [vmem:[#allocation2 + $0x18] sm:$0xff]
    %v248 = vld [vmem:[%s89 + $0x10] sm:$0xff]
    %v249 = vld [vmem:[%s89 + $0x18] sm:$0xff]
    %s250 = sld [smem:[#allocation7]]
    %s251 = sld [smem:[#allocation6]]
    %v252 = vstv %s251
    %v253 = vmul.f32 %v252, %v246
    %v254 = vmul.f32 %v252, %v247
    %v255 = vstv %s250
    %v256 = vadd.f32 %v255, %v253
    %v257 = vadd.f32 %v255, %v254
    %s258 = sld [smem:[#allocation6 + $0x1]]
    %v259 = vstv %s258
    %v260 = vmul.f32 %v259, %v248
    %v261 = vmul.f32 %v259, %v249
    %v262 = vadd.f32 %v256, %v260
    %v263 = vadd.f32 %v257, %v261
    %v264 = vmul.f32 %v262, %v262
    %v265 = vmul.f32 %v263, %v263
    %s266 = sld [smem:[#allocation7 + $0x1]]
    %s267 = sld [smem:[#allocation6 + $0x2]]
    %v268 = vstv %s267
    %v269 = vmul.f32 %v268, %v246
    %v270 = vmul.f32 %v268, %v247
    %v271 = vstv %s266
    %v272 = vadd.f32 %v271, %v269
    %v273 = vadd.f32 %v271, %v270
    %s274 = sld [smem:[#allocation6 + $0x3]]
    %v275 = vstv %s274
    %v276 = vmul.f32 %v275, %v248
    %v277 = vmul.f32 %v275, %v249
    %v278 = vadd.f32 %v272, %v276
    %v279 = vadd.f32 %v273, %v277
    %v280 = vmul.f32 %v278, %v278
    %v281 = vmul.f32 %v279, %v279
    %v282 = vadd.f32 %v264, %v280
    %v283 = vadd.f32 %v265, %v281
    %s284 = sld [smem:[#allocation9]]
    %v285 = vstv %s284
    %v286 = vsub.f32 %v285, %v282
    %v287 = vsub.f32 %v285, %v283
    %s288 = sld [smem:[#allocation7 + $0x2]]
    %s289 = sld [smem:[#allocation6 + $0x4]]
    %v290 = vstv %s289
    %v291 = vmul.f32 %v290, %v246
    %v292 = vmul.f32 %v290, %v247
    %v293 = vstv %s288
    %v294 = vadd.f32 %v293, %v291
    %v295 = vadd.f32 %v293, %v292
    %s296 = sld [smem:[#allocation6 + $0x5]]
    %v297 = vstv %s296
    %v298 = vmul.f32 %v297, %v248
    %v299 = vmul.f32 %v297, %v249
    %v300 = vadd.f32 %v294, %v298
    %v301 = vadd.f32 %v295, %v299
    %v302 = vmul.f32 %v300, %v300
    %v303 = vmul.f32 %v301, %v301
    %s304 = sld [smem:[#allocation7 + $0x3]]
    %s305 = sld [smem:[#allocation6 + $0x6]]
    %v306 = vstv %s305
    %v307 = vmul.f32 %v306, %v246
    %v308 = vmul.f32 %v306, %v247
    %v309 = vstv %s304
    %v310 = vadd.f32 %v309, %v307
    %v311 = vadd.f32 %v309, %v308
    %s312 = sld [smem:[#allocation6 + $0x7]]
    %v313 = vstv %s312
    %v314 = vmul.f32 %v313, %v248
    %v315 = vmul.f32 %v313, %v249
    %v316 = vadd.f32 %v310, %v314
    %v317 = vadd.f32 %v311, %v315
    %v318 = vmul.f32 %v316, %v316
    %v319 = vmul.f32 %v317, %v317
    %v320 = vadd.f32 %v302, %v318
    %v321 = vadd.f32 %v303, %v319
    %s322 = sld [smem:[#allocation9 + $0x1]]
    %v323 = vstv %s322
    %v324 = vsub.f32 %v323, %v320
    %v325 = vsub.f32 %v323, %v321
    %s326 = sld [smem:[#allocation7 + $0x4]]
    %s327 = sld [smem:[#allocation6 + $0x8]]
    %v328 = vstv %s327
    %v329 = vmul.f32 %v328, %v246
    %v330 = vmul.f32 %v328, %v247
    %v331 = vstv %s326
    %v332 = vadd.f32 %v331, %v329
    %v333 = vadd.f32 %v331, %v330
    %s334 = sld [smem:[#allocation6 + $0x9]]
    %v335 = vstv %s334
    %v336 = vmul.f32 %v335, %v248
    %v337 = vmul.f32 %v335, %v249
    %v338 = vadd.f32 %v332, %v336
    %v339 = vadd.f32 %v333, %v337
    %v340 = vmul.f32 %v338, %v338
    %v341 = vmul.f32 %v339, %v339
    %s342 = sld [smem:[#allocation7 + $0x5]]
    %s343 = sld [smem:[#allocation6 + $0xa]]
    %v344 = vstv %s343
    %v345 = vmul.f32 %v344, %v246
    %v346 = vmul.f32 %v344, %v247
    %v347 = vstv %s342
    %v348 = vadd.f32 %v347, %v345
    %v349 = vadd.f32 %v347, %v346
    %s350 = sld [smem:[#allocation6 + $0xb]]
    %v351 = vstv %s350
    %v352 = vmul.f32 %v351, %v248
    %v353 = vmul.f32 %v351, %v249
    %v354 = vadd.f32 %v348, %v352
    %v355 = vadd.f32 %v349, %v353
    %v356 = vmul.f32 %v354, %v354
    %v357 = vmul.f32 %v355, %v355
    %v358 = vadd.f32 %v340, %v356
    %v359 = vadd.f32 %v341, %v357
    %s360 = sld [smem:[#allocation9 + $0x2]]
    %v361 = vstv %s360
    %v362 = vsub.f32 %v361, %v358
    %v363 = vsub.f32 %v361, %v359
    %v364 = vmax.f32 %v286, %v324
    %v365 = vmax.f32 %v287, %v325
    %v366 = vmax.f32 %v364, %v362
    %v367 = vmax.f32 %v365, %v363
    %v368 = vsub.f32 %v286, %v366
    %v369 = vsub.f32 %v287, %v367
    %v370 = vmul.f32 %v368, 1.442695
    %v371 = vpow.pop %v370
    %v372 = vmul.f32 %v369, 1.442695
    %v373 = vpow.pop %v372
    %v374 = vsub.f32 %v324, %v366
    %v375 = vsub.f32 %v325, %v367
    %v376 = vmul.f32 %v374, 1.442695
    %v377 = vpow.pop %v376
    %v378 = vmul.f32 %v375, 1.442695
    %v379 = vpow.pop %v378
    %v380 = vadd.f32 %v371, %v377
    %v381 = vadd.f32 %v373, %v379
    %v382 = vsub.f32 %v362, %v366
    %v383 = vsub.f32 %v363, %v367
    %v384 = vmul.f32 %v382, 1.442695
    %v385 = vpow.pop %v384
    %v386 = vmul.f32 %v383, 1.442695
    %v387 = vpow.pop %v386
    %v388 = vadd.f32 %v380, %v385
    %v389 = vadd.f32 %v381, %v387
    %v390 = vlog2.pop %v388
    %v391 = vmul.f32 %v390, 0.6931472
    %v392 = vlog2.pop %v389
    %v393 = vmul.f32 %v392, 0.6931472
    %v394 = vadd.f32 %v366, %v391
    %v395 = vadd.f32 %v367, %v393
    %v396 = vld [vmem:[#allocation10 + $0x10] sm:$0xff]
    %v397 = vld [vmem:[#allocation10 + $0x18] sm:$0xff]
    %v398 = vmul.f32 %v394, %v394
    %v399 = vmul.f32 %v395, %v395
    %v400 = vadd.f32 %v396, %v398
    %v401 = vadd.f32 %v397, %v399
    %402 = vst [vmem:[#allocation10 + $0x10] sm:$0xff] %v400
    %403 = vst [vmem:[#allocation10 + $0x18] sm:$0xff] %v401
    %v404 = vld [vmem:[#allocation2 + $0x20] sm:$0xff]
    %v405 = vld [vmem:[#allocation2 + $0x28] sm:$0xff]
    %v406 = vld [vmem:[%s89 + $0x20] sm:$0xff]
    %v407 = vld [vmem:[%s89 + $0x28] sm:$0xff]
    %s408 = sld [smem:[#allocation7]]
    %s409 = sld [smem:[#allocation6]]
    %v410 = vstv %s409
    %v411 = vmul.f32 %v410, %v404
    %v412 = vmul.f32 %v410, %v405
    %v413 = vstv %s408
    %v414 = vadd.f32 %v413, %v411
    %v415 = vadd.f32 %v413, %v412
    %s416 = sld [smem:[#allocation6 + $0x1]]
    %v417 = vstv %s416
    %v418 = vmul.f32 %v417, %v406
    %v419 = vmul.f32 %v417, %v407
    %v420 = vadd.f32 %v414, %v418
    %v421 = vadd.f32 %v415, %v419
    %v422 = vmul.f32 %v420, %v420
    %v423 = vmul.f32 %v421, %v421
    %s424 = sld [smem:[#allocation7 + $0x1]]
    %s425 = sld [smem:[#allocation6 + $0x2]]
    %v426 = vstv %s425
    %v427 = vmul.f32 %v426, %v404
    %v428 = vmul.f32 %v426, %v405
    %v429 = vstv %s424
    %v430 = vadd.f32 %v429, %v427
    %v431 = vadd.f32 %v429, %v428
    %s432 = sld [smem:[#allocation6 + $0x3]]
    %v433 = vstv %s432
    %v434 = vmul.f32 %v433, %v406
    %v435 = vmul.f32 %v433, %v407
    %v436 = vadd.f32 %v430, %v434
    %v437 = vadd.f32 %v431, %v435
    %v438 = vmul.f32 %v436, %v436
    %v439 = vmul.f32 %v437, %v437
    %v440 = vadd.f32 %v422, %v438
    %v441 = vadd.f32 %v423, %v439
    %s442 = sld [smem:[#allocation9]]
    %v443 = vstv %s442
    %v444 = vsub.f32 %v443, %v440
    %v445 = vsub.f32 %v443, %v441
    %s446 = sld [smem:[#allocation7 + $0x2]]
    %s447 = sld [smem:[#allocation6 + $0x4]]
    %v448 = vstv %s447
    %v449 = vmul.f32 %v448, %v404
    %v450 = vmul.f32 %v448, %v405
    %v451 = vstv %s446
    %v452 = vadd.f32 %v451, %v449
    %v453 = vadd.f32 %v451, %v450
    %s454 = sld [smem:[#allocation6 + $0x5]]
    %v455 = vstv %s454
    %v456 = vmul.f32 %v455, %v406
    %v457 = vmul.f32 %v455, %v407
    %v458 = vadd.f32 %v452, %v456
    %v459 = vadd.f32 %v453, %v457
    %v460 = vmul.f32 %v458, %v458
    %v461 = vmul.f32 %v459, %v459
    %s462 = sld [smem:[#allocation7 + $0x3]]
    %s463 = sld [smem:[#allocation6 + $0x6]]
    %v464 = vstv %s463
    %v465 = vmul.f32 %v464, %v404
    %v466 = vmul.f32 %v464, %v405
    %v467 = vstv %s462
    %v468 = vadd.f32 %v467, %v465
    %v469 = vadd.f32 %v467, %v466
    %s470 = sld [smem:[#allocation6 + $0x7]]
    %v471 = vstv %s470
    %v472 = vmul.f32 %v471, %v406
    %v473 = vmul.f32 %v471, %v407
    %v474 = vadd.f32 %v468, %v472
    %v475 = vadd.f32 %v469, %v473
    %v476 = vmul.f32 %v474, %v474
    %v477 = vmul.f32 %v475, %v475
    %v478 = vadd.f32 %v460, %v476
    %v479 = vadd.f32 %v461, %v477
    %s480 = sld [smem:[#allocation9 + $0x1]]
    %v481 = vstv %s480
    %v482 = vsub.f32 %v481, %v478
    %v483 = vsub.f32 %v481, %v479
    %s484 = sld [smem:[#allocation7 + $0x4]]
    %s485 = sld [smem:[#allocation6 + $0x8]]
    %v486 = vstv %s485
    %v487 = vmul.f32 %v486, %v404
    %v488 = vmul.f32 %v486, %v405
    %v489 = vstv %s484
    %v490 = vadd.f32 %v489, %v487
    %v491 = vadd.f32 %v489, %v488
    %s492 = sld [smem:[#allocation6 + $0x9]]
    %v493 = vstv %s492
    %v494 = vmul.f32 %v493, %v406
    %v495 = vmul.f32 %v493, %v407
    %v496 = vadd.f32 %v490, %v494
    %v497 = vadd.f32 %v491, %v495
    %v498 = vmul.f32 %v496, %v496
    %v499 = vmul.f32 %v497, %v497
    %s500 = sld [smem:[#allocation7 + $0x5]]
    %s501 = sld [smem:[#allocation6 + $0xa]]
    %v502 = vstv %s501
    %v503 = vmul.f32 %v502, %v404
    %v504 = vmul.f32 %v502, %v405
    %v505 = vstv %s500
    %v506 = vadd.f32 %v505, %v503
    %v507 = vadd.f32 %v505, %v504
    %s508 = sld [smem:[#allocation6 + $0xb]]
    %v509 = vstv %s508
    %v510 = vmul.f32 %v509, %v406
    %v511 = vmul.f32 %v509, %v407
    %v512 = vadd.f32 %v506, %v510
    %v513 = vadd.f32 %v507, %v511
    %v514 = vmul.f32 %v512, %v512
    %v515 = vmul.f32 %v513, %v513
    %v516 = vadd.f32 %v498, %v514
    %v517 = vadd.f32 %v499, %v515
    %s518 = sld [smem:[#allocation9 + $0x2]]
    %v519 = vstv %s518
    %v520 = vsub.f32 %v519, %v516
    %v521 = vsub.f32 %v519, %v517
    %v522 = vmax.f32 %v444, %v482
    %v523 = vmax.f32 %v445, %v483
    %v524 = vmax.f32 %v522, %v520
    %v525 = vmax.f32 %v523, %v521
    %v526 = vsub.f32 %v444, %v524
    %v527 = vsub.f32 %v445, %v525
    %v528 = vmul.f32 %v526, 1.442695
    %v529 = vpow.pop %v528
    %v530 = vmul.f32 %v527, 1.442695
    %v531 = vpow.pop %v530
    %v532 = vsub.f32 %v482, %v524
    %v533 = vsub.f32 %v483, %v525
    %v534 = vmul.f32 %v532, 1.442695
    %v535 = vpow.pop %v534
    %v536 = vmul.f32 %v533, 1.442695
    %v537 = vpow.pop %v536
    %v538 = vadd.f32 %v529, %v535
    %v539 = vadd.f32 %v531, %v537
    %v540 = vsub.f32 %v520, %v524
    %v541 = vsub.f32 %v521, %v525
    %v542 = vmul.f32 %v540, 1.442695
    %v543 = vpow.pop %v542
    %v544 = vmul.f32 %v541, 1.442695
    %v545 = vpow.pop %v544
    %v546 = vadd.f32 %v538, %v543
    %v547 = vadd.f32 %v539, %v545
    %v548 = vlog2.pop %v546
    %v549 = vmul.f32 %v548, 0.6931472
    %v550 = vlog2.pop %v547
    %v551 = vmul.f32 %v550, 0.6931472
    %v552 = vadd.f32 %v524, %v549
    %v553 = vadd.f32 %v525, %v551
    %v554 = vld [vmem:[#allocation10 + $0x20] sm:$0xff]
    %v555 = vld [vmem:[#allocation10 + $0x28] sm:$0xff]
    %v556 = vmul.f32 %v552, %v552
    %v557 = vmul.f32 %v553, %v553
    %v558 = vadd.f32 %v554, %v556
    %v559 = vadd.f32 %v555, %v557
    %560 = vst [vmem:[#allocation10 + $0x20] sm:$0xff] %v558
    %561 = vst [vmem:[#allocation10 + $0x28] sm:$0xff] %v559
    %v562 = vld [vmem:[#allocation2 + $0x30] sm:$0xff]
    %v563 = vld [vmem:[#allocation2 + $0x38] sm:$0xff]
    %v564 = vld [vmem:[%s89 + $0x30] sm:$0xff]
    %v565 = vld [vmem:[%s89 + $0x38] sm:$0xff]
    %s566 = sld [smem:[#allocation7]]
    %s567 = sld [smem:[#allocation6]]
    %v568 = vstv %s567
    %v569 = vmul.f32 %v568, %v562
    %v570 = vmul.f32 %v568, %v563
    %v571 = vstv %s566
    %v572 = vadd.f32 %v571, %v569
    %v573 = vadd.f32 %v571, %v570
    %s574 = sld [smem:[#allocation6 + $0x1]]
    %v575 = vstv %s574
    %v576 = vmul.f32 %v575, %v564
    %v577 = vmul.f32 %v575, %v565
    %v578 = vadd.f32 %v572, %v576
    %v579 = vadd.f32 %v573, %v577
    %v580 = vmul.f32 %v578, %v578
    %v581 = vmul.f32 %v579, %v579
    %s582 = sld [smem:[#allocation7 + $0x1]]
    %s583 = sld [smem:[#allocation6 + $0x2]]
    %v584 = vstv %s583
    %v585 = vmul.f32 %v584, %v562
    %v586 = vmul.f32 %v584, %v563
    %v587 = vstv %s582
    %v588 = vadd.f32 %v587, %v585
    %v589 = vadd.f32 %v587, %v586
    %s590 = sld [smem:[#allocation6 + $0x3]]
    %v591 = vstv %s590
    %v592 = vmul.f32 %v591, %v564
    %v593 = vmul.f32 %v591, %v565
    %v594 = vadd.f32 %v588, %v592
    %v595 = vadd.f32 %v589, %v593
    %v596 = vmul.f32 %v594, %v594
    %v597 = vmul.f32 %v595, %v595
    %v598 = vadd.f32 %v580, %v596
    %v599 = vadd.f32 %v581, %v597
    %s600 = sld [smem:[#allocation9]]
    %v601 = vstv %s600
    %v602 = vsub.f32 %v601, %v598
    %v603 = vsub.f32 %v601, %v599
    %s604 = sld [smem:[#allocation7 + $0x2]]
    %s605 = sld [smem:[#allocation6 + $0x4]]
    %v606 = vstv %s605
    %v607 = vmul.f32 %v606, %v562
    %v608 = vmul.f32 %v606, %v563
    %v609 = vstv %s604
    %v610 = vadd.f32 %v609, %v607
    %v611 = vadd.f32 %v609, %v608
    %s612 = sld [smem:[#allocation6 + $0x5]]
    %v613 = vstv %s612
    %v614 = vmul.f32 %v613, %v564
    %v615 = vmul.f32 %v613, %v565
    %v616 = vadd.f32 %v610, %v614
    %v617 = vadd.f32 %v611, %v615
    %v618 = vmul.f32 %v616, %v616
    %v619 = vmul.f32 %v617, %v617
    %s620 = sld [smem:[#allocation7 + $0x3]]
    %s621 = sld [smem:[#allocation6 + $0x6]]
    %v622 = vstv %s621
    %v623 = vmul.f32 %v622, %v562
    %v624 = vmul.f32 %v622, %v563
    %v625 = vstv %s620
    %v626 = vadd.f32 %v625, %v623
    %v627 = vadd.f32 %v625, %v624
    %s628 = sld [smem:[#allocation6 + $0x7]]
    %v629 = vstv %s628
    %v630 = vmul.f32 %v629, %v564
    %v631 = vmul.f32 %v629, %v565
    %v632 = vadd.f32 %v626, %v630
    %v633 = vadd.f32 %v627, %v631
    %v634 = vmul.f32 %v632, %v632
    %v635 = vmul.f32 %v633, %v633
    %v636 = vadd.f32 %v618, %v634
    %v637 = vadd.f32 %v619, %v635
    %s638 = sld [smem:[#allocation9 + $0x1]]
    %v639 = vstv %s638
    %v640 = vsub.f32 %v639, %v636
    %v641 = vsub.f32 %v639, %v637
    %s642 = sld [smem:[#allocation7 + $0x4]]
    %s643 = sld [smem:[#allocation6 + $0x8]]
    %v644 = vstv %s643
    %v645 = vmul.f32 %v644, %v562
    %v646 = vmul.f32 %v644, %v563
    %v647 = vstv %s642
    %v648 = vadd.f32 %v647, %v645
    %v649 = vadd.f32 %v647, %v646
    %s650 = sld [smem:[#allocation6 + $0x9]]
    %v651 = vstv %s650
    %v652 = vmul.f32 %v651, %v564
    %v653 = vmul.f32 %v651, %v565
    %v654 = vadd.f32 %v648, %v652
    %v655 = vadd.f32 %v649, %v653
    %v656 = vmul.f32 %v654, %v654
    %v657 = vmul.f32 %v655, %v655
    %s658 = sld [smem:[#allocation7 + $0x5]]
    %s659 = sld [smem:[#allocation6 + $0xa]]
    %v660 = vstv %s659
    %v661 = vmul.f32 %v660, %v562
    %v662 = vmul.f32 %v660, %v563
    %v663 = vstv %s658
    %v664 = vadd.f32 %v663, %v661
    %v665 = vadd.f32 %v663, %v662
    %s666 = sld [smem:[#allocation6 + $0xb]]
    %v667 = vstv %s666
    %v668 = vmul.f32 %v667, %v564
    %v669 = vmul.f32 %v667, %v565
    %v670 = vadd.f32 %v664, %v668
    %v671 = vadd.f32 %v665, %v669
    %v672 = vmul.f32 %v670, %v670
    %v673 = vmul.f32 %v671, %v671
    %v674 = vadd.f32 %v656, %v672
    %v675 = vadd.f32 %v657, %v673
    %s676 = sld [smem:[#allocation9 + $0x2]]
    %v677 = vstv %s676
    %v678 = vsub.f32 %v677, %v674
    %v679 = vsub.f32 %v677, %v675
    %v680 = vmax.f32 %v602, %v640
    %v681 = vmax.f32 %v603, %v641
    %v682 = vmax.f32 %v680, %v678
    %v683 = vmax.f32 %v681, %v679
    %v684 = vsub.f32 %v602, %v682
    %v685 = vsub.f32 %v603, %v683
    %v686 = vmul.f32 %v684, 1.442695
    %v687 = vpow.pop %v686
    %v688 = vmul.f32 %v685, 1.442695
    %v689 = vpow.pop %v688
    %v690 = vsub.f32 %v640, %v682
    %v691 = vsub.f32 %v641, %v683
    %v692 = vmul.f32 %v690, 1.442695
    %v693 = vpow.pop %v692
    %v694 = vmul.f32 %v691, 1.442695
    %v695 = vpow.pop %v694
    %v696 = vadd.f32 %v687, %v693
    %v697 = vadd.f32 %v689, %v695
    %v698 = vsub.f32 %v678, %v682
    %v699 = vsub.f32 %v679, %v683
    %v700 = vmul.f32 %v698, 1.442695
    %v701 = vpow.pop %v700
    %v702 = vmul.f32 %v699, 1.442695
    %v703 = vpow.pop %v702
    %v704 = vadd.f32 %v696, %v701
    %v705 = vadd.f32 %v697, %v703
    %v706 = vlog2.pop %v704
    %v707 = vmul.f32 %v706, 0.6931472
    %v708 = vlog2.pop %v705
    %v709 = vmul.f32 %v708, 0.6931472
    %v710 = vadd.f32 %v682, %v707
    %v711 = vadd.f32 %v683, %v709
    %v712 = vld [vmem:[#allocation10 + $0x30] sm:$0xff]
    %v713 = vld [vmem:[#allocation10 + $0x38] sm:$0xff]
    %v714 = vmul.f32 %v710, %v710
    %v715 = vmul.f32 %v711, %v711
    %v716 = vadd.f32 %v712, %v714
    %v717 = vadd.f32 %v713, %v715
    %718 = vst [vmem:[#allocation10 + $0x30] sm:$0xff] %v716
    %719 = vst [vmem:[#allocation10 + $0x38] sm:$0xff] %v717
    %v720 = vld [vmem:[#allocation2 + $0x40] sm:$0xff]
    %v721 = vld [vmem:[#allocation2 + $0x48] sm:$0xff]
    %v722 = vld [vmem:[%s89 + $0x40] sm:$0xff]
    %v723 = vld [vmem:[%s89 + $0x48] sm:$0xff]
    %s724 = sld [smem:[#allocation7]]
    %s725 = sld [smem:[#allocation6]]
    %v726 = vstv %s725
    %v727 = vmul.f32 %v726, %v720
    %v728 = vmul.f32 %v726, %v721
    %v729 = vstv %s724
    %v730 = vadd.f32 %v729, %v727
    %v731 = vadd.f32 %v729, %v728
    %s732 = sld [smem:[#allocation6 + $0x1]]
    %v733 = vstv %s732
    %v734 = vmul.f32 %v733, %v722
    %v735 = vmul.f32 %v733, %v723
    %v736 = vadd.f32 %v730, %v734
    %v737 = vadd.f32 %v731, %v735
    %v738 = vmul.f32 %v736, %v736
    %v739 = vmul.f32 %v737, %v737
    %s740 = sld [smem:[#allocation7 + $0x1]]
    %s741 = sld [smem:[#allocation6 + $0x2]]
    %v742 = vstv %s741
    %v743 = vmul.f32 %v742, %v720
    %v744 = vmul.f32 %v742, %v721
    %v745 = vstv %s740
    %v746 = vadd.f32 %v745, %v743
    %v747 = vadd.f32 %v745, %v744
    %s748 = sld [smem:[#allocation6 + $0x3]]
    %v749 = vstv %s748
    %v750 = vmul.f32 %v749, %v722
    %v751 = vmul.f32 %v749, %v723
    %v752 = vadd.f32 %v746, %v750
    %v753 = vadd.f32 %v747, %v751
    %v754 = vmul.f32 %v752, %v752
    %v755 = vmul.f32 %v753, %v753
    %v756 = vadd.f32 %v738, %v754
    %v757 = vadd.f32 %v739, %v755
    %s758 = sld [smem:[#allocation9]]
    %v759 = vstv %s758
    %v760 = vsub.f32 %v759, %v756
    %v761 = vsub.f32 %v759, %v757
    %s762 = sld [smem:[#allocation7 + $0x2]]
    %s763 = sld [smem:[#allocation6 + $0x4]]
    %v764 = vstv %s763
    %v765 = vmul.f32 %v764, %v720
    %v766 = vmul.f32 %v764, %v721
    %v767 = vstv %s762
    %v768 = vadd.f32 %v767, %v765
    %v769 = vadd.f32 %v767, %v766
    %s770 = sld [smem:[#allocation6 + $0x5]]
    %v771 = vstv %s770
    %v772 = vmul.f32 %v771, %v722
    %v773 = vmul.f32 %v771, %v723
    %v774 = vadd.f32 %v768, %v772
    %v775 = vadd.f32 %v769, %v773
    %v776 = vmul.f32 %v774, %v774
    %v777 = vmul.f32 %v775, %v775
    %s778 = sld [smem:[#allocation7 + $0x3]]
    %s779 = sld [smem:[#allocation6 + $0x6]]
    %v780 = vstv %s779
    %v781 = vmul.f32 %v780, %v720
    %v782 = vmul.f32 %v780, %v721
    %v783 = vstv %s778
    %v784 = vadd.f32 %v783, %v781
    %v785 = vadd.f32 %v783, %v782
    %s786 = sld [smem:[#allocation6 + $0x7]]
    %v787 = vstv %s786
    %v788 = vmul.f32 %v787, %v722
    %v789 = vmul.f32 %v787, %v723
    %v790 = vadd.f32 %v784, %v788
    %v791 = vadd.f32 %v785, %v789
    %v792 = vmul.f32 %v790, %v790
    %v793 = vmul.f32 %v791, %v791
    %v794 = vadd.f32 %v776, %v792
    %v795 = vadd.f32 %v777, %v793
    %s796 = sld [smem:[#allocation9 + $0x1]]
    %v797 = vstv %s796
    %v798 = vsub.f32 %v797, %v794
    %v799 = vsub.f32 %v797, %v795
    %s800 = sld [smem:[#allocation7 + $0x4]]
    %s801 = sld [smem:[#allocation6 + $0x8]]
    %v802 = vstv %s801
    %v803 = vmul.f32 %v802, %v720
    %v804 = vmul.f32 %v802, %v721
    %v805 = vstv %s800
    %v806 = vadd.f32 %v805, %v803
    %v807 = vadd.f32 %v805, %v804
    %s808 = sld [smem:[#allocation6 + $0x9]]
    %v809 = vstv %s808
    %v810 = vmul.f32 %v809, %v722
    %v811 = vmul.f32 %v809, %v723
    %v812 = vadd.f32 %v806, %v810
    %v813 = vadd.f32 %v807, %v811
    %v814 = vmul.f32 %v812, %v812
    %v815 = vmul.f32 %v813, %v813
    %s816 = sld [smem:[#allocation7 + $0x5]]
    %s817 = sld [smem:[#allocation6 + $0xa]]
    %v818 = vstv %s817
    %v819 = vmul.f32 %v818, %v720
    %v820 = vmul.f32 %v818, %v721
    %v821 = vstv %s816
    %v822 = vadd.f32 %v821, %v819
    %v823 = vadd.f32 %v821, %v820
    %s824 = sld [smem:[#allocation6 + $0xb]]
    %v825 = vstv %s824
    %v826 = vmul.f32 %v825, %v722
    %v827 = vmul.f32 %v825, %v723
    %v828 = vadd.f32 %v822, %v826
    %v829 = vadd.f32 %v823, %v827
    %v830 = vmul.f32 %v828, %v828
    %v831 = vmul.f32 %v829, %v829
    %v832 = vadd.f32 %v814, %v830
    %v833 = vadd.f32 %v815, %v831
    %s834 = sld [smem:[#allocation9 + $0x2]]
    %v835 = vstv %s834
    %v836 = vsub.f32 %v835, %v832
    %v837 = vsub.f32 %v835, %v833
    %v838 = vmax.f32 %v760, %v798
    %v839 = vmax.f32 %v761, %v799
    %v840 = vmax.f32 %v838, %v836
    %v841 = vmax.f32 %v839, %v837
    %v842 = vsub.f32 %v760, %v840
    %v843 = vsub.f32 %v761, %v841
    %v844 = vmul.f32 %v842, 1.442695
    %v845 = vpow.pop %v844
    %v846 = vmul.f32 %v843, 1.442695
    %v847 = vpow.pop %v846
    %v848 = vsub.f32 %v798, %v840
    %v849 = vsub.f32 %v799, %v841
    %v850 = vmul.f32 %v848, 1.442695
    %v851 = vpow.pop %v850
    %v852 = vmul.f32 %v849, 1.442695
    %v853 = vpow.pop %v852
    %v854 = vadd.f32 %v845, %v851
    %v855 = vadd.f32 %v847, %v853
    %v856 = vsub.f32 %v836, %v840
    %v857 = vsub.f32 %v837, %v841
    %v858 = vmul.f32 %v856, 1.442695
    %v859 = vpow.pop %v858
    %v860 = vmul.f32 %v857, 1.442695
    %v861 = vpow.pop %v860
    %v862 = vadd.f32 %v854, %v859
    %v863 = vadd.f32 %v855, %v861
    %v864 = vlog2.pop %v862
    %v865 = vmul.f32 %v864, 0.6931472
    %v866 = vlog2.pop %v863
    %v867 = vmul.f32 %v866, 0.6931472
    %v868 = vadd.f32 %v840, %v865
    %v869 = vadd.f32 %v841, %v867
    %v870 = vld [vmem:[#allocation10 + $0x40] sm:$0xff]
    %v871 = vld [vmem:[#allocation10 + $0x48] sm:$0xff]
    %v872 = vmul.f32 %v868, %v868
    %v873 = vmul.f32 %v869, %v869
    %v874 = vadd.f32 %v870, %v872
    %v875 = vadd.f32 %v871, %v873
    %876 = vst [vmem:[#allocation10 + $0x40] sm:$0xff] %v874
    %877 = vst [vmem:[#allocation10 + $0x48] sm:$0xff] %v875
    // Predicated region
    $region38: #{tpu_custom_call.1} parent=1 // pred_check
      _
    $region39: #{tpu_custom_call.1} parent=1 // pred_check_branch
      %879 = sbr.rel (0) target = $region41
    $region40: #{tpu_custom_call.1} parent=1 // pred_region
      %s881 = ssub.s32 1280, 1280
      %882 = vsyncadd [#allocation4], %s881
      %s884 = sshll.u32 [#allocation10], 4
      %s885 = int_to_ptr.vmem [resolvable:$true] %s884
      %887 = dma.vmem_to_hbm [thread:$0]  %s885, 1280, %s4, [#allocation4]
    $region41: #{tpu_custom_call.1} parent=1 // pred_fallthru
      _
    // Predicated region
    $region42: #{tpu_custom_call.1} parent=1 // pred_check
      _
    $region43: #{tpu_custom_call.1} parent=1 // pred_check_branch
      %889 = sbr.rel (0) target = $region45
    $region44: #{tpu_custom_call.1} parent=1 // pred_region
      %890 = dma.done [#allocation4], 1280
    $region45: #{tpu_custom_call.1} parent=1 // pred_fallthru
      _
    %891 = vsyncpa [#allocation3], 1
    %892 = vsyncpa [#allocation4], 1
    %893 = vsyncpa [#allocation5], 1
    %894 = vsyncpa [#allocation8], 1

</llo_original>
